<compile_context>
chip_gen: v6e
topology: v6e:2x2x1
jax: 0.10.0
libtpu: 0.0.40
codegen_flags: <defaults>
</compile_context>

<pallas_src>
import jax
import jax.numpy as jnp
import numpy as np
from jax.experimental import pallas as pl
from jax.experimental.pallas import tpu as pltpu


def _round_up(x, m):
    return ((x + m - 1) // m) * m


def _num_tensorcores():
    """2 on megacore (v7x-class) chips, else 1. Grid-splitting only pays off with >1 TC."""
    try:
        kind = jax.devices()[0].device_kind.lower()
    except Exception:
        return 1
    return 2 if "v7" in kind else 1


def gcn_kernel(x_ref, k1_ref, b1_ref, k2_ref, o_ref):
    # x_ref: (Bt, S*N) f32 | k1_ref/k2_ref: (S*N, S*N) bf16 | b1_ref: (1, S*N) f32
    # o_ref: (Bt, S*N) f32
    x = x_ref[...].astype(k1_ref.dtype)
    # conv1 (1x1 over nodes) + residual (both folded into K1): one wide MXU matmul,
    # f32 accumulation; bias + ReLU in f32 on the VPU.
    h = jnp.dot(x, k1_ref[...], preferred_element_type=jnp.float32)
    h = jnp.maximum(h + b1_ref[...], 0.0)
    # conv2 (1x1 over states), no bias: second wide MXU matmul, lane-dense full store.
    o_ref[...] = jnp.dot(h.astype(k2_ref.dtype), k2_ref[...],
                         preferred_element_type=jnp.float32).astype(o_ref.dtype)


def prepare_gcn_weights(w1, b1, w2, *, weights_dtype=jnp.bfloat16):
    """Fold both 1x1 convs (and the residual) into per-column weights on the (B, S*N)
    layout.  Call ONCE at weight-load time and reuse across forward calls -- rebuilding
    the kron fold per call would write/read ~2*(S*N)^2 extra bytes of HBM every step."""
    N = w1.shape[0]
    S = w2.shape[0]
    SN = S * N
    # conv1 + residual:  K1 = kron(I_S, W1^T) + I_SN   (so h_pre = x @ K1 + b1)
    k1 = jnp.kron(jnp.eye(S, dtype=jnp.float32), w1.T.astype(jnp.float32))
    k1 = k1 + jnp.eye(SN, dtype=jnp.float32)
    # conv2:             K2 = kron(W2^T, I_N)
    k2 = jnp.kron(w2.T.astype(jnp.float32), jnp.eye(N, dtype=jnp.float32))
    # bias row on the (B, S*N) layout: b1_row[0, s*N + n] = b1[n]
    b1_row = jnp.tile(b1.astype(jnp.float32), S).reshape(1, SN)
    return k1.astype(weights_dtype), b1_row, k2.astype(weights_dtype)


def gcn_pallas(x, k1, b1_row, k2, *, block_b=None):
    B, S, N = x.shape
    SN = S * N
    assert k1.shape == (SN, SN) and k2.shape == (SN, SN) and b1_row.shape == (1, SN)

    # Guard the "weights stay VMEM-resident" assumption (breaks first on v7x: 64 MiB
    # physical / 32 MiB scoped VMEM): kron-folded weights scale as (S*N)^2.
    weight_bytes = 2 * SN * SN * k1.dtype.itemsize
    if weight_bytes > 16 * 1024 * 1024:
        # TODO(synk): blocked two-matmul fallback (extra grid axis over output columns)
        # for large num_state * num_node.
        raise NotImplementedError(
            "kron-folded GCN weights exceed the VMEM budget; use a blocked two-matmul path")

    x2 = x.reshape(B, SN)                        # free reshape -> lane-dense slab

    num_tc = _num_tensorcores()
    if block_b is None:
        # ~4 MiB f32 cap on the x block.  Below the cap: single grid step on 1-TC chips
        # (grid is a serial loop there, extra steps are pure overhead), one block per
        # TensorCore on megacore chips.
        cap = max(8, (4 << 20) // (SN * x.dtype.itemsize))
        if num_tc >= 2 and B % 16 == 0 and (B // 2) <= cap:
            block_b = B // 2                     # 2-way split for the 2 TensorCores
        elif B <= cap:
            block_b = B                          # single grid step (v5e / v6e / small B)
        else:
            block_b = max(8, cap - cap % 8)      # large batch: tile at the cap

    # Avoid padding whenever the block tiles the batch exactly (always true when
    # block_b == B, since a full-extent block dim needs no (8,128) alignment).
    if block_b == B:
        xp, Bp = x2, B
    else:
        block_b = _round_up(block_b, 8)
        Bp = _round_up(B, block_b)
        xp = jnp.pad(x2, ((0, Bp - B), (0, 0))) if Bp != B else x2
    grid = (Bp // block_b,)

    # Advisory cost estimate for XLA's scheduler (flops reflect the dense kron form).
    flops = 2 * 2 * Bp * SN * SN
    bytes_accessed = (2 * Bp * SN * x.dtype.itemsize      # x in + out (f32)
                      + 2 * SN * SN * k1.dtype.itemsize   # K1 + K2 (bf16)
                      + SN * 4)                           # bias row

    out2 = pl.pallas_call(
        gcn_kernel,
        out_shape=jax.ShapeDtypeStruct((Bp, SN), x.dtype),
        grid_spec=pltpu.PrefetchScalarGridSpec(
            num_scalar_prefetch=0,
            grid=grid,
            in_specs=[
                pl.BlockSpec((block_b, SN), lambda i: (i, 0)),   # x   (lane-dense)
                pl.BlockSpec((SN, SN), lambda i: (0, 0)),        # K1  (VMEM-resident)
                pl.BlockSpec((1, SN), lambda i: (0, 0)),         # b1 row
                pl.BlockSpec((SN, SN), lambda i: (0, 0)),        # K2  (VMEM-resident)
            ],
            out_specs=pl.BlockSpec((block_b, SN), lambda i: (i, 0)),  # lane-dense store
        ),
        compiler_params=pltpu.CompilerParams(
            dimension_semantics=("parallel",),
            vmem_limit_bytes=32 * 1024 * 1024,
        ),
        cost_estimate=pl.CostEstimate(
            flops=flops, transcendentals=0, bytes_accessed=bytes_accessed),
    )(xp, k1, b1_row, k2)

    return out2[:B].reshape(B, S, N)


def gcn_reference(x, w1, b1, w2):
    # Pure-JAX f32 reference mirroring the PyTorch forward.
    h = jnp.einsum("nm,bsm->bsn", w1, x) + b1[None, None, :]
    h = jnp.maximum(h + x, 0.0)
    return jnp.einsum("st,btn->bsn", w2, h)


if __name__ == "__main__":
    # Shapes consistent with GCN(num_state, num_node).
    B, num_state, num_node = 64, 32, 16

    key = jax.random.PRNGKey(0)
    kx, kw1, kb1, kw2 = jax.random.split(key, 4)

    x = jax.random.normal(kx, (B, num_state, num_node), dtype=jnp.float32)
    # conv1 = Conv1d(num_node, num_node, 1)  -> weight (num_node, num_node), bias (num_node,)
    w1 = jax.random.normal(kw1, (num_node, num_node), dtype=jnp.float32) * 0.1
    b1 = jax.random.normal(kb1, (num_node,), dtype=jnp.float32) * 0.1
    # conv2 = Conv1d(num_state, num_state, 1, bias=False) -> weight (num_state, num_state)
    w2 = jax.random.normal(kw2, (num_state, num_state), dtype=jnp.float32) * 0.1

    # Fold + cast the weights ONCE (cached across forward calls in real use).
    k1, b1_row, k2 = prepare_gcn_weights(w1, b1, w2)

    out = jax.block_until_ready(gcn_pallas(x, k1, b1_row, k2))
    ref = jax.block_until_ready(gcn_reference(x, w1, b1, w2))

    # bf16 MXU inputs with f32 accumulation -> loosened tolerance vs the f32 reference.
    out_np, ref_np = np.asarray(out), np.asarray(ref)
    if not np.allclose(out_np, ref_np, atol=5e-2, rtol=5e-2):
        raise AssertionError(
            f"Pallas GCN output does not match reference; "
            f"max abs diff = {np.max(np.abs(out_np - ref_np)):.3e}")

    print("KERNEL_OK")
</pallas_src>

<mosaic_0001>
module attributes {stable_mosaic.version = 11 : i64} {
  func.func @gcn_kernel(%arg0: i32, %arg1: memref<64x512xf32, #tpu.memory_space<vmem>>, %arg2: memref<512x512xbf16, #tpu.memory_space<vmem>>, %arg3: memref<1x512xf32, #tpu.memory_space<vmem>>, %arg4: memref<512x512xbf16, #tpu.memory_space<vmem>>, %arg5: memref<64x512xf32, #tpu.memory_space<vmem>>) attributes {dimension_semantics = [#tpu.dimension_semantics<parallel>], iteration_bounds = array<i64: 1>, scalar_prefetch = 0 : i64, scratch_operands = 0 : i64, tpu.core_type = #tpu.core_type<tc>, window_params = [{transform_indices = @transform_0, window_bounds = array<i64: 64, 512>}, {pipeline_mode = #tpu.pipeline_mode<synchronous>, transform_indices = @transform_1, window_bounds = array<i64: 512, 512>}, {pipeline_mode = #tpu.pipeline_mode<synchronous>, transform_indices = @transform_2, window_bounds = array<i64: 1, 512>}, {pipeline_mode = #tpu.pipeline_mode<synchronous>, transform_indices = @transform_3, window_bounds = array<i64: 512, 512>}, {transform_indices = @transform_4, window_bounds = array<i64: 64, 512>}]} {
    %c0 = arith.constant 0 : index
    %c0_0 = arith.constant 0 : index
    %0 = vector.load %arg1[%c0, %c0_0] : memref<64x512xf32, #tpu.memory_space<vmem>>, vector<64x512xf32>
    %1 = arith.truncf %0 : vector<64x512xf32> to vector<64x512xbf16>
    %c0_1 = arith.constant 0 : index
    %c0_2 = arith.constant 0 : index
    %2 = vector.load %arg2[%c0_1, %c0_2] : memref<512x512xbf16, #tpu.memory_space<vmem>>, vector<512x512xbf16>
    %cst = arith.constant dense<0.000000e+00> : vector<64x512xf32>
    %3 = tpu.matmul %1, %2, %cst {dimension_numbers = #tpu.dot_dimension_numbers<[1], [0], [0], [1], [0, 0, 1, 1], [], []>} : vector<64x512xbf16>, vector<512x512xbf16>, vector<64x512xf32> -> vector<64x512xf32>
    %c0_3 = arith.constant 0 : index
    %c0_4 = arith.constant 0 : index
    %4 = vector.load %arg3[%c0_3, %c0_4] : memref<1x512xf32, #tpu.memory_space<vmem>>, vector<1x512xf32>
    %5 = vector.broadcast %4 : vector<1x512xf32> to vector<64x512xf32>
    %6 = arith.addf %3, %5 : vector<64x512xf32>
    %cst_5 = arith.constant 0.000000e+00 : f32
    %7 = vector.broadcast %cst_5 : f32 to vector<64x512xf32>
    %8 = arith.maximumf %6, %7 : vector<64x512xf32>
    %9 = arith.truncf %8 : vector<64x512xf32> to vector<64x512xbf16>
    %c0_6 = arith.constant 0 : index
    %c0_7 = arith.constant 0 : index
    %10 = vector.load %arg4[%c0_6, %c0_7] : memref<512x512xbf16, #tpu.memory_space<vmem>>, vector<512x512xbf16>
    %cst_8 = arith.constant dense<0.000000e+00> : vector<64x512xf32>
    %11 = tpu.matmul %9, %10, %cst_8 {dimension_numbers = #tpu.dot_dimension_numbers<[1], [0], [0], [1], [0, 0, 1, 1], [], []>} : vector<64x512xbf16>, vector<512x512xbf16>, vector<64x512xf32> -> vector<64x512xf32>
    %c0_9 = arith.constant 0 : index
    %c0_10 = arith.constant 0 : index
    %12 = vector.load %arg5[%c0_9, %c0_10] : memref<64x512xf32, #tpu.memory_space<vmem>>, vector<64x512xf32>
    tpu.vector_store %arg5[%c0_9, %c0_10], %11 {strides = array<i32>} : memref<64x512xf32, #tpu.memory_space<vmem>>, vector<64x512xf32>,
    return
  }
  func.func @transform_0(%arg0: i32) -> (i32, i32) {
    %c0_i32 = arith.constant 0 : i32
    %c0_i32_0 = arith.constant 0 : i32
    return %arg0, %c0_i32 : i32, i32
  }
  func.func @transform_1(%arg0: i32) -> (i32, i32) {
    %c0_i32 = arith.constant 0 : i32
    %c0_i32_0 = arith.constant 0 : i32
    %c0_i32_1 = arith.constant 0 : i32
    return %c0_i32, %c0_i32_0 : i32, i32
  }
  func.func @transform_2(%arg0: i32) -> (i32, i32) {
    %c0_i32 = arith.constant 0 : i32
    %c0_i32_0 = arith.constant 0 : i32
    %c0_i32_1 = arith.constant 0 : i32
    return %c0_i32, %c0_i32_0 : i32, i32
  }
  func.func @transform_3(%arg0: i32) -> (i32, i32) {
    %c0_i32 = arith.constant 0 : i32
    %c0_i32_0 = arith.constant 0 : i32
    %c0_i32_1 = arith.constant 0 : i32
    return %c0_i32, %c0_i32_0 : i32, i32
  }
  func.func @transform_4(%arg0: i32) -> (i32, i32) {
    %c0_i32 = arith.constant 0 : i32
    %c0_i32_0 = arith.constant 0 : i32
    return %arg0, %c0_i32 : i32, i32
  }
}

</mosaic_0001>

<llo_original>
// kernel: tpu_custom_call.1
$region0: #{tpu_custom_call.1}
  #allocation0 [shape = 'u32[]', space=smem, size = 0x4, offset = 0x4, fixed_abs, tag = 'smem constant byte address 0x4 - core index']
  #allocation1 [shape = 'u32[144,128]{1,0:T(1,128)}', space=vmem, size = 0x12000, scoped, tag = 'internal scratch']
  %s0 = inlined_call_operand.hbm [shape: f32[64,512], index: 0, kind: input, shape index: {}]
  %s1 = inlined_call_operand.hbm [shape: bf16[512,512], index: 1, kind: input, shape index: {}]
  %s2 = inlined_call_operand.hbm [shape: f32[1,512], index: 2, kind: input, shape index: {}]
  %s3 = inlined_call_operand.hbm [shape: bf16[512,512], index: 3, kind: input, shape index: {}]
  %s4 = inlined_call_operand.hbm [shape: f32[64,512], index: 4, kind: output, shape index: {}]
  %s5 = sld [smem:[#allocation0]]
  $region42: #{tpu_custom_call.1} parent=0
    _
  %s7 = ssub.s32 1, %s5
  %s8 = scalar_select 0, %s7, %s5
  $region1: #{tpu_custom_call.1} parent=0
    #allocation2 [shape = 'u8[131072]{0}', space=vmem, size = 0x20000, scoped, tag = 'input window, operand 0, single buffered']
    #allocation3 [shape = 's32[1]{0}', space=sflag, size = 0x4, scoped, tag = 'scoped memory for tpu_custom_call.1']
    #allocation4 [shape = 's32[1]{0}', space=sflag, size = 0x4, scoped, tag = 'scoped memory for tpu_custom_call.1']
    #allocation5 [shape = 'u8[524288]{0}', space=vmem, size = 0x80000, scoped, tag = 'input window, operand 1, single buffered']
    #allocation6 [shape = 's32[1]{0}', space=sflag, size = 0x4, scoped, tag = 'scoped memory for tpu_custom_call.1']
    #allocation7 [shape = 'u8[2048]{0}', space=vmem, size = 0x800, scoped, tag = 'input window, operand 2, single buffered']
    #allocation8 [shape = 'u8[524288]{0}', space=vmem, size = 0x80000, scoped, tag = 'input window, operand 3, single buffered']
    #allocation9 [shape = 's32[1]{0}', space=sflag, size = 0x4, scoped, tag = 'scoped memory for tpu_custom_call.1']
    #allocation10 [shape = 'u8[131072]{0}', space=vmem, size = 0x20000, scoped, tag = 'output window, operand 0, single buffered']
    %9 = vsyncpa [#allocation3], 0
    %10 = vsyncpa [#allocation6], 0
    %11 = vsyncpa [#allocation9], 0
    %12 = vsyncpa [#allocation4], 0
    // Predicated region
    $region2: #{tpu_custom_call.1} parent=1 // pred_check
      _
    $region3: #{tpu_custom_call.1} parent=1 // pred_check_branch
      %14 = sbr.rel (0) target = $region5
    $region4: #{tpu_custom_call.1} parent=1 // pred_region
      %s16 = ssub.s32 4096, 4096
      %17 = vsyncadd [#allocation3], %s16
      %s18 = sshll.u32 [#allocation2], 4
      %s19 = int_to_ptr.vmem [resolvable:$true] %s18
      %24 = dma.hbm_to_vmem [thread:$0]  %s0, 4096, %s19, [#allocation3], 512, 512, 32
    $region5: #{tpu_custom_call.1} parent=1 // pred_fallthru
      _
    // Predicated region
    $region6: #{tpu_custom_call.1} parent=1 // pred_check
      _
    $region7: #{tpu_custom_call.1} parent=1 // pred_check_branch
      %26 = sbr.rel (0) target = $region9
    $region8: #{tpu_custom_call.1} parent=1 // pred_region
      %s28 = ssub.s32 16384, 16384
      %29 = vsyncadd [#allocation6], %s28
      %s30 = sshll.u32 [#allocation5], 4
      %s31 = int_to_ptr.vmem [resolvable:$true] %s30
      %36 = dma.hbm_to_vmem [thread:$0]  %s1, 16384, %s31, [#allocation6], 256, 256, 16
    $region9: #{tpu_custom_call.1} parent=1 // pred_fallthru
      _
    // Predicated region
    $region10: #{tpu_custom_call.1} parent=1 // pred_check
      _
    $region11: #{tpu_custom_call.1} parent=1 // pred_check_branch
      %38 = sbr.rel (0) target = $region13
    $region12: #{tpu_custom_call.1} parent=1 // pred_region
      %s40 = ssub.s32 64, 64
      %41 = vsyncadd [#allocation6], %s40
      %s43 = sshll.u32 [#allocation7], 4
      %s44 = int_to_ptr.vmem [resolvable:$true] %s43
      %46 = dma.hbm_to_vmem [thread:$0]  %s2, 64, %s44, [#allocation6]
    $region13: #{tpu_custom_call.1} parent=1 // pred_fallthru
      _
    // Predicated region
    $region14: #{tpu_custom_call.1} parent=1 // pred_check
      _
    $region15: #{tpu_custom_call.1} parent=1 // pred_check_branch
      %48 = sbr.rel (0) target = $region17
    $region16: #{tpu_custom_call.1} parent=1 // pred_region
      %s50 = ssub.s32 16384, 16384
      %51 = vsyncadd [#allocation9], %s50
      %s52 = sshll.u32 [#allocation8], 4
      %s53 = int_to_ptr.vmem [resolvable:$true] %s52
      %58 = dma.hbm_to_vmem [thread:$0]  %s3, 16384, %s53, [#allocation9], 256, 256, 16
    $region17: #{tpu_custom_call.1} parent=1 // pred_fallthru
      _
    // Predicated region
    $region18: #{tpu_custom_call.1} parent=1 // pred_check
      _
    $region19: #{tpu_custom_call.1} parent=1 // pred_check_branch
      %60 = sbr.rel (0) target = $region21
    $region20: #{tpu_custom_call.1} parent=1 // pred_region
      %61 = dma.done [#allocation3], 4096
    $region21: #{tpu_custom_call.1} parent=1 // pred_fallthru
      _
    // Predicated region
    $region22: #{tpu_custom_call.1} parent=1 // pred_check
      _
    $region23: #{tpu_custom_call.1} parent=1 // pred_check_branch
      %63 = sbr.rel (0) target = $region25
    $region24: #{tpu_custom_call.1} parent=1 // pred_region
      %64 = dma.done [#allocation6], 16384
    $region25: #{tpu_custom_call.1} parent=1 // pred_fallthru
      _
    // Predicated region
    $region26: #{tpu_custom_call.1} parent=1 // pred_check
      _
    $region27: #{tpu_custom_call.1} parent=1 // pred_check_branch
      %66 = sbr.rel (0) target = $region29
    $region28: #{tpu_custom_call.1} parent=1 // pred_region
      %67 = dma.done [#allocation6], 64
    $region29: #{tpu_custom_call.1} parent=1 // pred_fallthru
      _
    // Predicated region
    $region30: #{tpu_custom_call.1} parent=1 // pred_check
      _
    $region31: #{tpu_custom_call.1} parent=1 // pred_check_branch
      %69 = sbr.rel (0) target = $region33
    $region32: #{tpu_custom_call.1} parent=1 // pred_region
      %70 = dma.done [#allocation9], 16384
    $region33: #{tpu_custom_call.1} parent=1 // pred_fallthru
      _
    %v71 = vld [vmem:[#allocation2] sm:$0xff]
    %v72 = vld [vmem:[#allocation2 + $0x8] sm:$0xff]
    %v73 = vld [vmem:[#allocation2 + $0x10] sm:$0xff]
    %v74 = vld [vmem:[#allocation2 + $0x18] sm:$0xff]
    %v75 = vld [vmem:[#allocation2 + $0x20] sm:$0xff]
    %v76 = vld [vmem:[#allocation2 + $0x28] sm:$0xff]
    %v77 = vld [vmem:[#allocation2 + $0x30] sm:$0xff]
    %v78 = vld [vmem:[#allocation2 + $0x38] sm:$0xff]
    %v79 = vld [vmem:[#allocation2 + $0x40] sm:$0xff]
    %v80 = vld [vmem:[#allocation2 + $0x48] sm:$0xff]
    %v81 = vld [vmem:[#allocation2 + $0x50] sm:$0xff]
    %v82 = vld [vmem:[#allocation2 + $0x58] sm:$0xff]
    %v83 = vld [vmem:[#allocation2 + $0x60] sm:$0xff]
    %v84 = vld [vmem:[#allocation2 + $0x68] sm:$0xff]
    %v85 = vld [vmem:[#allocation2 + $0x70] sm:$0xff]
    %v86 = vld [vmem:[#allocation2 + $0x78] sm:$0xff]
    %v87 = vld [vmem:[#allocation2 + $0x80] sm:$0xff]
    %v88 = vld [vmem:[#allocation2 + $0x88] sm:$0xff]
    %v89 = vld [vmem:[#allocation2 + $0x90] sm:$0xff]
    %v90 = vld [vmem:[#allocation2 + $0x98] sm:$0xff]
    %v91 = vld [vmem:[#allocation2 + $0xa0] sm:$0xff]
    %v92 = vld [vmem:[#allocation2 + $0xa8] sm:$0xff]
    %v93 = vld [vmem:[#allocation2 + $0xb0] sm:$0xff]
    %v94 = vld [vmem:[#allocation2 + $0xb8] sm:$0xff]
    %v95 = vld [vmem:[#allocation2 + $0xc0] sm:$0xff]
    %v96 = vld [vmem:[#allocation2 + $0xc8] sm:$0xff]
    %v97 = vld [vmem:[#allocation2 + $0xd0] sm:$0xff]
    %v98 = vld [vmem:[#allocation2 + $0xd8] sm:$0xff]
    %v99 = vld [vmem:[#allocation2 + $0xe0] sm:$0xff]
    %v100 = vld [vmem:[#allocation2 + $0xe8] sm:$0xff]
    %v101 = vld [vmem:[#allocation2 + $0xf0] sm:$0xff]
    %v102 = vld [vmem:[#allocation2 + $0xf8] sm:$0xff]
    %v103 = vpack.c.bf16 %v75, %v71
    %v104 = vpack.c.bf16 %v76, %v72
    %v105 = vpack.c.bf16 %v77, %v73
    %v106 = vpack.c.bf16 %v78, %v74
    %v107 = vpack.c.bf16 %v83, %v79
    %v108 = vpack.c.bf16 %v84, %v80
    %v109 = vpack.c.bf16 %v85, %v81
    %v110 = vpack.c.bf16 %v86, %v82
    %v111 = vpack.c.bf16 %v91, %v87
    %v112 = vpack.c.bf16 %v92, %v88
    %v113 = vpack.c.bf16 %v93, %v89
    %v114 = vpack.c.bf16 %v94, %v90
    %v115 = vpack.c.bf16 %v99, %v95
    %v116 = vpack.c.bf16 %v100, %v96
    %v117 = vpack.c.bf16 %v101, %v97
    %v118 = vpack.c.bf16 %v102, %v98
    %v119 = vld [vmem:[#allocation5] sm:$0xff]
    %v120 = vld [vmem:[#allocation5 + $0x8] sm:$0xff]
    %v121 = vld [vmem:[#allocation5 + $0x10] sm:$0xff]
    %v122 = vld [vmem:[#allocation5 + $0x18] sm:$0xff]
    %v123 = vld [vmem:[#allocation5 + $0x20] sm:$0xff]
    %v124 = vld [vmem:[#allocation5 + $0x28] sm:$0xff]
    %v125 = vld [vmem:[#allocation5 + $0x30] sm:$0xff]
    %v126 = vld [vmem:[#allocation5 + $0x38] sm:$0xff]
    %v127 = vld [vmem:[#allocation5 + $0x40] sm:$0xff]
    %v128 = vld [vmem:[#allocation5 + $0x48] sm:$0xff]
    %v129 = vld [vmem:[#allocation5 + $0x50] sm:$0xff]
    %v130 = vld [vmem:[#allocation5 + $0x58] sm:$0xff]
    %v131 = vld [vmem:[#allocation5 + $0x60] sm:$0xff]
    %v132 = vld [vmem:[#allocation5 + $0x68] sm:$0xff]
    %v133 = vld [vmem:[#allocation5 + $0x70] sm:$0xff]
    %v134 = vld [vmem:[#allocation5 + $0x78] sm:$0xff]
    %v135 = vld [vmem:[#allocation5 + $0x80] sm:$0xff]
    %v136 = vld [vmem:[#allocation5 + $0x88] sm:$0xff]
    %v137 = vld [vmem:[#allocation5 + $0x90] sm:$0xff]
    %v138 = vld [vmem:[#allocation5 + $0x98] sm:$0xff]
    %v139 = vld [vmem:[#allocation5 + $0xa0] sm:$0xff]
    %v140 = vld [vmem:[#allocation5 + $0xa8] sm:$0xff]
    %v141 = vld [vmem:[#allocation5 + $0xb0] sm:$0xff]
    %v142 = vld [vmem:[#allocation5 + $0xb8] sm:$0xff]
    %v143 = vld [vmem:[#allocation5 + $0xc0] sm:$0xff]
    %v144 = vld [vmem:[#allocation5 + $0xc8] sm:$0xff]
    %v145 = vld [vmem:[#allocation5 + $0xd0] sm:$0xff]
    %v146 = vld [vmem:[#allocation5 + $0xd8] sm:$0xff]
    %v147 = vld [vmem:[#allocation5 + $0xe0] sm:$0xff]
    %v148 = vld [vmem:[#allocation5 + $0xe8] sm:$0xff]
    %v149 = vld [vmem:[#allocation5 + $0xf0] sm:$0xff]
    %v150 = vld [vmem:[#allocation5 + $0xf8] sm:$0xff]
    %v151 = vld [vmem:[#allocation5 + $0x100] sm:$0xff]
    %v152 = vld [vmem:[#allocation5 + $0x108] sm:$0xff]
    %v153 = vld [vmem:[#allocation5 + $0x110] sm:$0xff]
    %v154 = vld [vmem:[#allocation5 + $0x118] sm:$0xff]
    %v155 = vld [vmem:[#allocation5 + $0x120] sm:$0xff]
    %v156 = vld [vmem:[#allocation5 + $0x128] sm:$0xff]
    %v157 = vld [vmem:[#allocation5 + $0x130] sm:$0xff]
    %v158 = vld [vmem:[#allocation5 + $0x138] sm:$0xff]
    %v159 = vld [vmem:[#allocation5 + $0x140] sm:$0xff]
    %v160 = vld [vmem:[#allocation5 + $0x148] sm:$0xff]
    %v161 = vld [vmem:[#allocation5 + $0x150] sm:$0xff]
    %v162 = vld [vmem:[#allocation5 + $0x158] sm:$0xff]
    %v163 = vld [vmem:[#allocation5 + $0x160] sm:$0xff]
    %v164 = vld [vmem:[#allocation5 + $0x168] sm:$0xff]
    %v165 = vld [vmem:[#allocation5 + $0x170] sm:$0xff]
    %v166 = vld [vmem:[#allocation5 + $0x178] sm:$0xff]
    %v167 = vld [vmem:[#allocation5 + $0x180] sm:$0xff]
    %v168 = vld [vmem:[#allocation5 + $0x188] sm:$0xff]
    %v169 = vld [vmem:[#allocation5 + $0x190] sm:$0xff]
    %v170 = vld [vmem:[#allocation5 + $0x198] sm:$0xff]
    %v171 = vld [vmem:[#allocation5 + $0x1a0] sm:$0xff]
    %v172 = vld [vmem:[#allocation5 + $0x1a8] sm:$0xff]
    %v173 = vld [vmem:[#allocation5 + $0x1b0] sm:$0xff]
    %v174 = vld [vmem:[#allocation5 + $0x1b8] sm:$0xff]
    %v175 = vld [vmem:[#allocation5 + $0x1c0] sm:$0xff]
    %v176 = vld [vmem:[#allocation5 + $0x1c8] sm:$0xff]
    %v177 = vld [vmem:[#allocation5 + $0x1d0] sm:$0xff]
    %v178 = vld [vmem:[#allocation5 + $0x1d8] sm:$0xff]
    %v179 = vld [vmem:[#allocation5 + $0x1e0] sm:$0xff]
    %v180 = vld [vmem:[#allocation5 + $0x1e8] sm:$0xff]
    %v181 = vld [vmem:[#allocation5 + $0x1f0] sm:$0xff]
    %v182 = vld [vmem:[#allocation5 + $0x1f8] sm:$0xff]
    %v183 = vld [vmem:[#allocation5 + $0x200] sm:$0xff]
    %v184 = vld [vmem:[#allocation5 + $0x208] sm:$0xff]
    %v185 = vld [vmem:[#allocation5 + $0x210] sm:$0xff]
    %v186 = vld [vmem:[#allocation5 + $0x218] sm:$0xff]
    %v187 = vld [vmem:[#allocation5 + $0x220] sm:$0xff]
    %v188 = vld [vmem:[#allocation5 + $0x228] sm:$0xff]
    %v189 = vld [vmem:[#allocation5 + $0x230] sm:$0xff]
    %v190 = vld [vmem:[#allocation5 + $0x238] sm:$0xff]
    %v191 = vld [vmem:[#allocation5 + $0x240] sm:$0xff]
    %v192 = vld [vmem:[#allocation5 + $0x248] sm:$0xff]
    %v193 = vld [vmem:[#allocation5 + $0x250] sm:$0xff]
    %v194 = vld [vmem:[#allocation5 + $0x258] sm:$0xff]
    %v195 = vld [vmem:[#allocation5 + $0x260] sm:$0xff]
    %v196 = vld [vmem:[#allocation5 + $0x268] sm:$0xff]
    %v197 = vld [vmem:[#allocation5 + $0x270] sm:$0xff]
    %v198 = vld [vmem:[#allocation5 + $0x278] sm:$0xff]
    %v199 = vld [vmem:[#allocation5 + $0x280] sm:$0xff]
    %v200 = vld [vmem:[#allocation5 + $0x288] sm:$0xff]
    %v201 = vld [vmem:[#allocation5 + $0x290] sm:$0xff]
    %v202 = vld [vmem:[#allocation5 + $0x298] sm:$0xff]
    %v203 = vld [vmem:[#allocation5 + $0x2a0] sm:$0xff]
    %v204 = vld [vmem:[#allocation5 + $0x2a8] sm:$0xff]
    %v205 = vld [vmem:[#allocation5 + $0x2b0] sm:$0xff]
    %v206 = vld [vmem:[#allocation5 + $0x2b8] sm:$0xff]
    %v207 = vld [vmem:[#allocation5 + $0x2c0] sm:$0xff]
    %v208 = vld [vmem:[#allocation5 + $0x2c8] sm:$0xff]
    %v209 = vld [vmem:[#allocation5 + $0x2d0] sm:$0xff]
    %v210 = vld [vmem:[#allocation5 + $0x2d8] sm:$0xff]
    %v211 = vld [vmem:[#allocation5 + $0x2e0] sm:$0xff]
    %v212 = vld [vmem:[#allocation5 + $0x2e8] sm:$0xff]
    %v213 = vld [vmem:[#allocation5 + $0x2f0] sm:$0xff]
    %v214 = vld [vmem:[#allocation5 + $0x2f8] sm:$0xff]
    %v215 = vld [vmem:[#allocation5 + $0x300] sm:$0xff]
    %v216 = vld [vmem:[#allocation5 + $0x308] sm:$0xff]
    %v217 = vld [vmem:[#allocation5 + $0x310] sm:$0xff]
    %v218 = vld [vmem:[#allocation5 + $0x318] sm:$0xff]
    %v219 = vld [vmem:[#allocation5 + $0x320] sm:$0xff]
    %v220 = vld [vmem:[#allocation5 + $0x328] sm:$0xff]
    %v221 = vld [vmem:[#allocation5 + $0x330] sm:$0xff]
    %v222 = vld [vmem:[#allocation5 + $0x338] sm:$0xff]
    %v223 = vld [vmem:[#allocation5 + $0x340] sm:$0xff]
    %v224 = vld [vmem:[#allocation5 + $0x348] sm:$0xff]
    %v225 = vld [vmem:[#allocation5 + $0x350] sm:$0xff]
    %v226 = vld [vmem:[#allocation5 + $0x358] sm:$0xff]
    %v227 = vld [vmem:[#allocation5 + $0x360] sm:$0xff]
    %v228 = vld [vmem:[#allocation5 + $0x368] sm:$0xff]
    %v229 = vld [vmem:[#allocation5 + $0x370] sm:$0xff]
    %v230 = vld [vmem:[#allocation5 + $0x378] sm:$0xff]
    %v231 = vld [vmem:[#allocation5 + $0x380] sm:$0xff]
    %v232 = vld [vmem:[#allocation5 + $0x388] sm:$0xff]
    %v233 = vld [vmem:[#allocation5 + $0x390] sm:$0xff]
    %v234 = vld [vmem:[#allocation5 + $0x398] sm:$0xff]
    %v235 = vld [vmem:[#allocation5 + $0x3a0] sm:$0xff]
    %v236 = vld [vmem:[#allocation5 + $0x3a8] sm:$0xff]
    %v237 = vld [vmem:[#allocation5 + $0x3b0] sm:$0xff]
    %v238 = vld [vmem:[#allocation5 + $0x3b8] sm:$0xff]
    %v239 = vld [vmem:[#allocation5 + $0x3c0] sm:$0xff]
    %v240 = vld [vmem:[#allocation5 + $0x3c8] sm:$0xff]
    %v241 = vld [vmem:[#allocation5 + $0x3d0] sm:$0xff]
    %v242 = vld [vmem:[#allocation5 + $0x3d8] sm:$0xff]
    %v243 = vld [vmem:[#allocation5 + $0x3e0] sm:$0xff]
    %v244 = vld [vmem:[#allocation5 + $0x3e8] sm:$0xff]
    %v245 = vld [vmem:[#allocation5 + $0x3f0] sm:$0xff]
    %v246 = vld [vmem:[#allocation5 + $0x3f8] sm:$0xff]
    %v247 = vld [vmem:[#allocation7] sm:$0xf]
    %v249 = vlaneseq
    %v250 = vshrl.u32 %v249, 7
    %v251 = vsub.s32 0, %v250
    %v252 = vrot.slane %v247, %v251
    %v253 = vlaneseq
    %v254 = vshrl.u32 %v253, 7
    %v255 = vsub.s32 1, %v254
    %v256 = vrot.slane %v247, %v255
    %v257 = vlaneseq
    %v258 = vshrl.u32 %v257, 7
    %v259 = vsub.s32 2, %v258
    %v260 = vrot.slane %v247, %v259
    %v261 = vlaneseq
    %v262 = vshrl.u32 %v261, 7
    %v263 = vsub.s32 3, %v262
    %v264 = vrot.slane %v247, %v263
    %v397 = vunpack.c.l.b16 %v119
    %v398 = vunpack.c.h.b16 %v119
    %v399 = vunpack.c.l.b16 %v120
    %v400 = vunpack.c.h.b16 %v120
    %v401 = vunpack.c.l.b16 %v121
    %v402 = vunpack.c.h.b16 %v121
    %v403 = vunpack.c.l.b16 %v122
    %v404 = vunpack.c.h.b16 %v122
    %v405 = vunpack.c.l.b16 %v123
    %v406 = vunpack.c.h.b16 %v123
    %v407 = vunpack.c.l.b16 %v124
    %v408 = vunpack.c.h.b16 %v124
    %v409 = vunpack.c.l.b16 %v125
    %v410 = vunpack.c.h.b16 %v125
    %v411 = vunpack.c.l.b16 %v126
    %v412 = vunpack.c.h.b16 %v126
    %v413 = vunpack.c.l.b16 %v127
    %v414 = vunpack.c.h.b16 %v127
    %v415 = vunpack.c.l.b16 %v128
    %v416 = vunpack.c.h.b16 %v128
    %v417 = vunpack.c.l.b16 %v129
    %v418 = vunpack.c.h.b16 %v129
    %v419 = vunpack.c.l.b16 %v130
    %v420 = vunpack.c.h.b16 %v130
    %v421 = vunpack.c.l.b16 %v131
    %v422 = vunpack.c.h.b16 %v131
    %v423 = vunpack.c.l.b16 %v132
    %v424 = vunpack.c.h.b16 %v132
    %v425 = vunpack.c.l.b16 %v133
    %v426 = vunpack.c.h.b16 %v133
    %v427 = vunpack.c.l.b16 %v134
    %v428 = vunpack.c.h.b16 %v134
    %v429 = vunpack.c.l.b16 %v135
    %v430 = vunpack.c.h.b16 %v135
    %v431 = vunpack.c.l.b16 %v136
    %v432 = vunpack.c.h.b16 %v136
    %v433 = vunpack.c.l.b16 %v137
    %v434 = vunpack.c.h.b16 %v137
    %v435 = vunpack.c.l.b16 %v138
    %v436 = vunpack.c.h.b16 %v138
    %v437 = vunpack.c.l.b16 %v139
    %v438 = vunpack.c.h.b16 %v139
    %v439 = vunpack.c.l.b16 %v140
    %v440 = vunpack.c.h.b16 %v140
    %v441 = vunpack.c.l.b16 %v141
    %v442 = vunpack.c.h.b16 %v141
    %v443 = vunpack.c.l.b16 %v142
    %v444 = vunpack.c.h.b16 %v142
    %v445 = vunpack.c.l.b16 %v143
    %v446 = vunpack.c.h.b16 %v143
    %v447 = vunpack.c.l.b16 %v144
    %v448 = vunpack.c.h.b16 %v144
    %v449 = vunpack.c.l.b16 %v145
    %v450 = vunpack.c.h.b16 %v145
    %v451 = vunpack.c.l.b16 %v146
    %v452 = vunpack.c.h.b16 %v146
    %v453 = vunpack.c.l.b16 %v147
    %v454 = vunpack.c.h.b16 %v147
    %v455 = vunpack.c.l.b16 %v148
    %v456 = vunpack.c.h.b16 %v148
    %v457 = vunpack.c.l.b16 %v149
    %v458 = vunpack.c.h.b16 %v149
    %v459 = vunpack.c.l.b16 %v150
    %v460 = vunpack.c.h.b16 %v150
    %v461 = vunpack.c.l.b16 %v151
    %v462 = vunpack.c.h.b16 %v151
    %v463 = vunpack.c.l.b16 %v152
    %v464 = vunpack.c.h.b16 %v152
    %v465 = vunpack.c.l.b16 %v153
    %v466 = vunpack.c.h.b16 %v153
    %v467 = vunpack.c.l.b16 %v154
    %v468 = vunpack.c.h.b16 %v154
    %v469 = vunpack.c.l.b16 %v155
    %v470 = vunpack.c.h.b16 %v155
    %v471 = vunpack.c.l.b16 %v156
    %v472 = vunpack.c.h.b16 %v156
    %v473 = vunpack.c.l.b16 %v157
    %v474 = vunpack.c.h.b16 %v157
    %v475 = vunpack.c.l.b16 %v158
    %v476 = vunpack.c.h.b16 %v158
    %v477 = vunpack.c.l.b16 %v159
    %v478 = vunpack.c.h.b16 %v159
    %v479 = vunpack.c.l.b16 %v160
    %v480 = vunpack.c.h.b16 %v160
    %v481 = vunpack.c.l.b16 %v161
    %v482 = vunpack.c.h.b16 %v161
    %v483 = vunpack.c.l.b16 %v162
    %v484 = vunpack.c.h.b16 %v162
    %v485 = vunpack.c.l.b16 %v163
    %v486 = vunpack.c.h.b16 %v163
    %v487 = vunpack.c.l.b16 %v164
    %v488 = vunpack.c.h.b16 %v164
    %v489 = vunpack.c.l.b16 %v165
    %v490 = vunpack.c.h.b16 %v165
    %v491 = vunpack.c.l.b16 %v166
    %v492 = vunpack.c.h.b16 %v166
    %v493 = vunpack.c.l.b16 %v167
    %v494 = vunpack.c.h.b16 %v167
    %v495 = vunpack.c.l.b16 %v168
    %v496 = vunpack.c.h.b16 %v168
    %v497 = vunpack.c.l.b16 %v169
    %v498 = vunpack.c.h.b16 %v169
    %v499 = vunpack.c.l.b16 %v170
    %v500 = vunpack.c.h.b16 %v170
    %v501 = vunpack.c.l.b16 %v171
    %v502 = vunpack.c.h.b16 %v171
    %v503 = vunpack.c.l.b16 %v172
    %v504 = vunpack.c.h.b16 %v172
    %v505 = vunpack.c.l.b16 %v173
    %v506 = vunpack.c.h.b16 %v173
    %v507 = vunpack.c.l.b16 %v174
    %v508 = vunpack.c.h.b16 %v174
    %v509 = vunpack.c.l.b16 %v175
    %v510 = vunpack.c.h.b16 %v175
    %v511 = vunpack.c.l.b16 %v176
    %v512 = vunpack.c.h.b16 %v176
    %v513 = vunpack.c.l.b16 %v177
    %v514 = vunpack.c.h.b16 %v177
    %v515 = vunpack.c.l.b16 %v178
    %v516 = vunpack.c.h.b16 %v178
    %v517 = vunpack.c.l.b16 %v179
    %v518 = vunpack.c.h.b16 %v179
    %v519 = vunpack.c.l.b16 %v180
    %v520 = vunpack.c.h.b16 %v180
    %v521 = vunpack.c.l.b16 %v181
    %v522 = vunpack.c.h.b16 %v181
    %v523 = vunpack.c.l.b16 %v182
    %v524 = vunpack.c.h.b16 %v182
    %v525 = vunpack.c.l.b16 %v183
    %v526 = vunpack.c.h.b16 %v183
    %v527 = vunpack.c.l.b16 %v184
    %v528 = vunpack.c.h.b16 %v184
    %v529 = vunpack.c.l.b16 %v185
    %v530 = vunpack.c.h.b16 %v185
    %v531 = vunpack.c.l.b16 %v186
    %v532 = vunpack.c.h.b16 %v186
    %v533 = vunpack.c.l.b16 %v187
    %v534 = vunpack.c.h.b16 %v187
    %v535 = vunpack.c.l.b16 %v188
    %v536 = vunpack.c.h.b16 %v188
    %v537 = vunpack.c.l.b16 %v189
    %v538 = vunpack.c.h.b16 %v189
    %v539 = vunpack.c.l.b16 %v190
    %v540 = vunpack.c.h.b16 %v190
    %v541 = vunpack.c.l.b16 %v191
    %v542 = vunpack.c.h.b16 %v191
    %v543 = vunpack.c.l.b16 %v192
    %v544 = vunpack.c.h.b16 %v192
    %v545 = vunpack.c.l.b16 %v193
    %v546 = vunpack.c.h.b16 %v193
    %v547 = vunpack.c.l.b16 %v194
    %v548 = vunpack.c.h.b16 %v194
    %v549 = vunpack.c.l.b16 %v195
    %v550 = vunpack.c.h.b16 %v195
    %v551 = vunpack.c.l.b16 %v196
    %v552 = vunpack.c.h.b16 %v196
    %v553 = vunpack.c.l.b16 %v197
    %v554 = vunpack.c.h.b16 %v197
    %v555 = vunpack.c.l.b16 %v198
    %v556 = vunpack.c.h.b16 %v198
    %v557 = vunpack.c.l.b16 %v199
    %v558 = vunpack.c.h.b16 %v199
    %v559 = vunpack.c.l.b16 %v200
    %v560 = vunpack.c.h.b16 %v200
    %v561 = vunpack.c.l.b16 %v201
    %v562 = vunpack.c.h.b16 %v201
    %v563 = vunpack.c.l.b16 %v202
    %v564 = vunpack.c.h.b16 %v202
    %v565 = vunpack.c.l.b16 %v203
    %v566 = vunpack.c.h.b16 %v203
    %v567 = vunpack.c.l.b16 %v204
    %v568 = vunpack.c.h.b16 %v204
    %v569 = vunpack.c.l.b16 %v205
    %v570 = vunpack.c.h.b16 %v205
    %v571 = vunpack.c.l.b16 %v206
    %v572 = vunpack.c.h.b16 %v206
    %v573 = vunpack.c.l.b16 %v207
    %v574 = vunpack.c.h.b16 %v207
    %v575 = vunpack.c.l.b16 %v208
    %v576 = vunpack.c.h.b16 %v208
    %v577 = vunpack.c.l.b16 %v209
    %v578 = vunpack.c.h.b16 %v209
    %v579 = vunpack.c.l.b16 %v210
    %v580 = vunpack.c.h.b16 %v210
    %v581 = vunpack.c.l.b16 %v211
    %v582 = vunpack.c.h.b16 %v211
    %v583 = vunpack.c.l.b16 %v212
    %v584 = vunpack.c.h.b16 %v212
    %v585 = vunpack.c.l.b16 %v213
    %v586 = vunpack.c.h.b16 %v213
    %v587 = vunpack.c.l.b16 %v214
    %v588 = vunpack.c.h.b16 %v214
    %v589 = vunpack.c.l.b16 %v215
    %v590 = vunpack.c.h.b16 %v215
    %v591 = vunpack.c.l.b16 %v216
    %v592 = vunpack.c.h.b16 %v216
    %v593 = vunpack.c.l.b16 %v217
    %v594 = vunpack.c.h.b16 %v217
    %v595 = vunpack.c.l.b16 %v218
    %v596 = vunpack.c.h.b16 %v218
    %v597 = vunpack.c.l.b16 %v219
    %v598 = vunpack.c.h.b16 %v219
    %v599 = vunpack.c.l.b16 %v220
    %v600 = vunpack.c.h.b16 %v220
    %v601 = vunpack.c.l.b16 %v221
    %v602 = vunpack.c.h.b16 %v221
    %v603 = vunpack.c.l.b16 %v222
    %v604 = vunpack.c.h.b16 %v222
    %v605 = vunpack.c.l.b16 %v223
    %v606 = vunpack.c.h.b16 %v223
    %v607 = vunpack.c.l.b16 %v224
    %v608 = vunpack.c.h.b16 %v224
    %v609 = vunpack.c.l.b16 %v225
    %v610 = vunpack.c.h.b16 %v225
    %v611 = vunpack.c.l.b16 %v226
    %v612 = vunpack.c.h.b16 %v226
    %v613 = vunpack.c.l.b16 %v227
    %v614 = vunpack.c.h.b16 %v227
    %v615 = vunpack.c.l.b16 %v228
    %v616 = vunpack.c.h.b16 %v228
    %v617 = vunpack.c.l.b16 %v229
    %v618 = vunpack.c.h.b16 %v229
    %v619 = vunpack.c.l.b16 %v230
    %v620 = vunpack.c.h.b16 %v230
    %v621 = vunpack.c.l.b16 %v231
    %v622 = vunpack.c.h.b16 %v231
    %v623 = vunpack.c.l.b16 %v232
    %v624 = vunpack.c.h.b16 %v232
    %v625 = vunpack.c.l.b16 %v233
    %v626 = vunpack.c.h.b16 %v233
    %v627 = vunpack.c.l.b16 %v234
    %v628 = vunpack.c.h.b16 %v234
    %v629 = vunpack.c.l.b16 %v235
    %v630 = vunpack.c.h.b16 %v235
    %v631 = vunpack.c.l.b16 %v236
    %v632 = vunpack.c.h.b16 %v236
    %v633 = vunpack.c.l.b16 %v237
    %v634 = vunpack.c.h.b16 %v237
    %v635 = vunpack.c.l.b16 %v238
    %v636 = vunpack.c.h.b16 %v238
    %v637 = vunpack.c.l.b16 %v239
    %v638 = vunpack.c.h.b16 %v239
    %v639 = vunpack.c.l.b16 %v240
    %v640 = vunpack.c.h.b16 %v240
    %v641 = vunpack.c.l.b16 %v241
    %v642 = vunpack.c.h.b16 %v241
    %v643 = vunpack.c.l.b16 %v242
    %v644 = vunpack.c.h.b16 %v242
    %v645 = vunpack.c.l.b16 %v243
    %v646 = vunpack.c.h.b16 %v243
    %v647 = vunpack.c.l.b16 %v244
    %v648 = vunpack.c.h.b16 %v244
    %v649 = vunpack.c.l.b16 %v245
    %v650 = vunpack.c.h.b16 %v245
    %v651 = vunpack.c.l.b16 %v246
    %v652 = vunpack.c.h.b16 %v246
    %v653 = vpack.c.b16 %v401, %v397
    %v654 = vpack.c.b16 %v402, %v398
    %v655 = vpack.c.b16 %v403, %v399
    %v656 = vpack.c.b16 %v404, %v400
    %v657 = vpack.c.b16 %v409, %v405
    %v658 = vpack.c.b16 %v410, %v406
    %v659 = vpack.c.b16 %v411, %v407
    %v660 = vpack.c.b16 %v412, %v408
    %v661 = vpack.c.b16 %v417, %v413
    %v662 = vpack.c.b16 %v418, %v414
    %v663 = vpack.c.b16 %v419, %v415
    %v664 = vpack.c.b16 %v420, %v416
    %v665 = vpack.c.b16 %v425, %v421
    %v666 = vpack.c.b16 %v426, %v422
    %v667 = vpack.c.b16 %v427, %v423
    %v668 = vpack.c.b16 %v428, %v424
    %v669 = vpack.c.b16 %v433, %v429
    %v670 = vpack.c.b16 %v434, %v430
    %v671 = vpack.c.b16 %v435, %v431
    %v672 = vpack.c.b16 %v436, %v432
    %v673 = vpack.c.b16 %v441, %v437
    %v674 = vpack.c.b16 %v442, %v438
    %v675 = vpack.c.b16 %v443, %v439
    %v676 = vpack.c.b16 %v444, %v440
    %v677 = vpack.c.b16 %v449, %v445
    %v678 = vpack.c.b16 %v450, %v446
    %v679 = vpack.c.b16 %v451, %v447
    %v680 = vpack.c.b16 %v452, %v448
    %v681 = vpack.c.b16 %v457, %v453
    %v682 = vpack.c.b16 %v458, %v454
    %v683 = vpack.c.b16 %v459, %v455
    %v684 = vpack.c.b16 %v460, %v456
    %v685 = vpack.c.b16 %v465, %v461
    %v686 = vpack.c.b16 %v466, %v462
    %v687 = vpack.c.b16 %v467, %v463
    %v688 = vpack.c.b16 %v468, %v464
    %v689 = vpack.c.b16 %v473, %v469
    %v690 = vpack.c.b16 %v474, %v470
    %v691 = vpack.c.b16 %v475, %v471
    %v692 = vpack.c.b16 %v476, %v472
    %v693 = vpack.c.b16 %v481, %v477
    %v694 = vpack.c.b16 %v482, %v478
    %v695 = vpack.c.b16 %v483, %v479
    %v696 = vpack.c.b16 %v484, %v480
    %v697 = vpack.c.b16 %v489, %v485
    %v698 = vpack.c.b16 %v490, %v486
    %v699 = vpack.c.b16 %v491, %v487
    %v700 = vpack.c.b16 %v492, %v488
    %v701 = vpack.c.b16 %v497, %v493
    %v702 = vpack.c.b16 %v498, %v494
    %v703 = vpack.c.b16 %v499, %v495
    %v704 = vpack.c.b16 %v500, %v496
    %v705 = vpack.c.b16 %v505, %v501
    %v706 = vpack.c.b16 %v506, %v502
    %v707 = vpack.c.b16 %v507, %v503
    %v708 = vpack.c.b16 %v508, %v504
    %v709 = vpack.c.b16 %v513, %v509
    %v710 = vpack.c.b16 %v514, %v510
    %v711 = vpack.c.b16 %v515, %v511
    %v712 = vpack.c.b16 %v516, %v512
    %v713 = vpack.c.b16 %v521, %v517
    %v714 = vpack.c.b16 %v522, %v518
    %v715 = vpack.c.b16 %v523, %v519
    %v716 = vpack.c.b16 %v524, %v520
    %v717 = vpack.c.b16 %v529, %v525
    %v718 = vpack.c.b16 %v530, %v526
    %v719 = vpack.c.b16 %v531, %v527
    %v720 = vpack.c.b16 %v532, %v528
    %v721 = vpack.c.b16 %v537, %v533
    %v722 = vpack.c.b16 %v538, %v534
    %v723 = vpack.c.b16 %v539, %v535
    %v724 = vpack.c.b16 %v540, %v536
    %v725 = vpack.c.b16 %v545, %v541
    %v726 = vpack.c.b16 %v546, %v542
    %v727 = vpack.c.b16 %v547, %v543
    %v728 = vpack.c.b16 %v548, %v544
    %v729 = vpack.c.b16 %v553, %v549
    %v730 = vpack.c.b16 %v554, %v550
    %v731 = vpack.c.b16 %v555, %v551
    %v732 = vpack.c.b16 %v556, %v552
    %v733 = vpack.c.b16 %v561, %v557
    %v734 = vpack.c.b16 %v562, %v558
    %v735 = vpack.c.b16 %v563, %v559
    %v736 = vpack.c.b16 %v564, %v560
    %v737 = vpack.c.b16 %v569, %v565
    %v738 = vpack.c.b16 %v570, %v566
    %v739 = vpack.c.b16 %v571, %v567
    %v740 = vpack.c.b16 %v572, %v568
    %v741 = vpack.c.b16 %v577, %v573
    %v742 = vpack.c.b16 %v578, %v574
    %v743 = vpack.c.b16 %v579, %v575
    %v744 = vpack.c.b16 %v580, %v576
    %v745 = vpack.c.b16 %v585, %v581
    %v746 = vpack.c.b16 %v586, %v582
    %v747 = vpack.c.b16 %v587, %v583
    %v748 = vpack.c.b16 %v588, %v584
    %v749 = vpack.c.b16 %v593, %v589
    %v750 = vpack.c.b16 %v594, %v590
    %v751 = vpack.c.b16 %v595, %v591
    %v752 = vpack.c.b16 %v596, %v592
    %v753 = vpack.c.b16 %v601, %v597
    %v754 = vpack.c.b16 %v602, %v598
    %v755 = vpack.c.b16 %v603, %v599
    %v756 = vpack.c.b16 %v604, %v600
    %v757 = vpack.c.b16 %v609, %v605
    %v758 = vpack.c.b16 %v610, %v606
    %v759 = vpack.c.b16 %v611, %v607
    %v760 = vpack.c.b16 %v612, %v608
    %v761 = vpack.c.b16 %v617, %v613
    %v762 = vpack.c.b16 %v618, %v614
    %v763 = vpack.c.b16 %v619, %v615
    %v764 = vpack.c.b16 %v620, %v616
    %v765 = vpack.c.b16 %v625, %v621
    %v766 = vpack.c.b16 %v626, %v622
    %v767 = vpack.c.b16 %v627, %v623
    %v768 = vpack.c.b16 %v628, %v624
    %v769 = vpack.c.b16 %v633, %v629
    %v770 = vpack.c.b16 %v634, %v630
    %v771 = vpack.c.b16 %v635, %v631
    %v772 = vpack.c.b16 %v636, %v632
    %v773 = vpack.c.b16 %v641, %v637
    %v774 = vpack.c.b16 %v642, %v638
    %v775 = vpack.c.b16 %v643, %v639
    %v776 = vpack.c.b16 %v644, %v640
    %v777 = vpack.c.b16 %v649, %v645
    %v778 = vpack.c.b16 %v650, %v646
    %v779 = vpack.c.b16 %v651, %v647
    %v780 = vpack.c.b16 %v652, %v648
    %909 = vmatprep.subr.bf16.mxu0 %v682
    %910 = vmatpush1.bf16.msra.mxu0 %v681
    %911 = vmatprep.subr.bf16.mxu0 %v678
    %912 = vmatpush1.bf16.msra.mxu0 %v677
    %913 = vmatprep.subr.bf16.mxu0 %v674
    %914 = vmatpush1.bf16.msra.mxu0 %v673
    %915 = vmatprep.subr.bf16.mxu0 %v670
    %916 = vmatpush1.bf16.msra.mxu0 %v669
    %917 = vmatprep.subr.bf16.mxu0 %v666
    %918 = vmatpush1.bf16.msra.mxu0 %v665
    %919 = vmatprep.subr.bf16.mxu0 %v662
    %920 = vmatpush1.bf16.msra.mxu0 %v661
    %921 = vmatprep.subr.bf16.mxu0 %v658
    %922 = vmatpush1.bf16.msra.mxu0 %v657
    %923 = vmatprep.subr.bf16.mxu0 %v654
    %924 = vmatpush1.bf16.msra.mxu0 %v653
    %925 = vmatprep.subr.bf16.mxu0 %v714
    %926 = vmatpush2.bf16.msra.mxu0 %v713
    %927 = vmatprep.subr.bf16.mxu0 %v710
    %928 = vmatpush2.bf16.msra.mxu0 %v709
    %929 = vmatprep.subr.bf16.mxu0 %v706
    %930 = vmatpush2.bf16.msra.mxu0 %v705
    %931 = vmatprep.subr.bf16.mxu0 %v702
    %932 = vmatpush2.bf16.msra.mxu0 %v701
    %933 = vmatprep.subr.bf16.mxu0 %v698
    %934 = vmatpush2.bf16.msra.mxu0 %v697
    %935 = vmatprep.subr.bf16.mxu0 %v694
    %936 = vmatpush2.bf16.msra.mxu0 %v693
    %937 = vmatprep.subr.bf16.mxu0 %v690
    %938 = vmatpush2.bf16.msra.mxu0 %v689
    %939 = vmatprep.subr.bf16.mxu0 %v686
    %940 = vmatpush2.bf16.msra.mxu0 %v685
    %941 = vmatprep.mubr.bf16.mxu0 %v104
    %942 = vmatmul.mubr.bf16.gmra.mxu0 %v103
    %v943 = vpop.f32.mrf.mxu0
    %v944 = vadd.f32 %v252, %v943
    %v945 = vpop.f32.mrf.mxu0
    %v946 = vadd.f32 %v256, %v945
    %v947 = vpop.f32.mrf.mxu0
    %v948 = vadd.f32 %v252, %v947
    %v949 = vpop.f32.mrf.mxu0
    %v950 = vadd.f32 %v256, %v949
    %951 = vmatprep.mubr.bf16.mxu0 %v108
    %952 = vmatmul.mubr.bf16.gmra.mxu0 %v107
    %v953 = vpop.f32.mrf.mxu0
    %v954 = vadd.f32 %v252, %v953
    %v955 = vpop.f32.mrf.mxu0
    %v956 = vadd.f32 %v256, %v955
    %v957 = vpop.f32.mrf.mxu0
    %v958 = vadd.f32 %v252, %v957
    %v959 = vpop.f32.mrf.mxu0
    %v960 = vadd.f32 %v256, %v959
    %961 = vmatprep.mubr.bf16.mxu0 %v112
    %962 = vmatmul.mubr.bf16.gmra.mxu0 %v111
    %v963 = vpop.f32.mrf.mxu0
    %v964 = vadd.f32 %v252, %v963
    %v965 = vpop.f32.mrf.mxu0
    %v966 = vadd.f32 %v256, %v965
    %v967 = vpop.f32.mrf.mxu0
    %v968 = vadd.f32 %v252, %v967
    %v969 = vpop.f32.mrf.mxu0
    %v970 = vadd.f32 %v256, %v969
    %971 = vmatprep.mubr.bf16.mxu0 %v116
    %972 = vmatmul.mubr.bf16.gmra.mxu0 %v115
    %v973 = vpop.f32.mrf.mxu0
    %v974 = vadd.f32 %v252, %v973
    %v975 = vpop.f32.mrf.mxu0
    %v976 = vadd.f32 %v256, %v975
    %v977 = vpop.f32.mrf.mxu0
    %v978 = vadd.f32 %v252, %v977
    %v979 = vpop.f32.mrf.mxu0
    %v980 = vadd.f32 %v256, %v979
    %981 = vdwg.mxu0
    %982 = vmatprep.subr.bf16.mxu0 %v746
    %983 = vmatpush1.bf16.msra.mxu0 %v745
    %984 = vmatprep.subr.bf16.mxu0 %v742
    %985 = vmatpush1.bf16.msra.mxu0 %v741
    %986 = vmatprep.subr.bf16.mxu0 %v738
    %987 = vmatpush1.bf16.msra.mxu0 %v737
    %988 = vmatprep.subr.bf16.mxu0 %v734
    %989 = vmatpush1.bf16.msra.mxu0 %v733
    %990 = vmatprep.subr.bf16.mxu0 %v730
    %991 = vmatpush1.bf16.msra.mxu0 %v729
    %992 = vmatprep.subr.bf16.mxu0 %v726
    %993 = vmatpush1.bf16.msra.mxu0 %v725
    %994 = vmatprep.subr.bf16.mxu0 %v722
    %995 = vmatpush1.bf16.msra.mxu0 %v721
    %996 = vmatprep.subr.bf16.mxu0 %v718
    %997 = vmatpush1.bf16.msra.mxu0 %v717
    %998 = vmatprep.subr.bf16.mxu0 %v778
    %999 = vmatpush2.bf16.msra.mxu0 %v777
    %1000 = vmatprep.subr.bf16.mxu0 %v774
    %1001 = vmatpush2.bf16.msra.mxu0 %v773
    %1002 = vmatprep.subr.bf16.mxu0 %v770
    %1003 = vmatpush2.bf16.msra.mxu0 %v769
    %1004 = vmatprep.subr.bf16.mxu0 %v766
    %1005 = vmatpush2.bf16.msra.mxu0 %v765
    %1006 = vmatprep.subr.bf16.mxu0 %v762
    %1007 = vmatpush2.bf16.msra.mxu0 %v761
    %1008 = vmatprep.subr.bf16.mxu0 %v758
    %1009 = vmatpush2.bf16.msra.mxu0 %v757
    %1010 = vmatprep.subr.bf16.mxu0 %v754
    %1011 = vmatpush2.bf16.msra.mxu0 %v753
    %1012 = vmatprep.subr.bf16.mxu0 %v750
    %1013 = vmatpush2.bf16.msra.mxu0 %v749
    %1014 = vmatprep.mubr.bf16.mxu0 %v106
    %1015 = vmatmul.mubr.bf16.gmra.mxu0 %v105
    %v1016 = vpop.f32.mrf.mxu0
    %v1017 = vadd.f32 %v944, %v1016
    %v1018 = vpop.f32.mrf.mxu0
    %v1019 = vadd.f32 %v946, %v1018
    %v1020 = vpop.f32.mrf.mxu0
    %v1021 = vadd.f32 %v948, %v1020
    %v1022 = vpop.f32.mrf.mxu0
    %v1023 = vadd.f32 %v950, %v1022
    %1024 = vmatprep.mubr.bf16.mxu0 %v110
    %1025 = vmatmul.mubr.bf16.gmra.mxu0 %v109
    %v1026 = vpop.f32.mrf.mxu0
    %v1027 = vadd.f32 %v954, %v1026
    %v1028 = vpop.f32.mrf.mxu0
    %v1029 = vadd.f32 %v956, %v1028
    %v1030 = vpop.f32.mrf.mxu0
    %v1031 = vadd.f32 %v958, %v1030
    %v1032 = vpop.f32.mrf.mxu0
    %v1033 = vadd.f32 %v960, %v1032
    %1034 = vmatprep.mubr.bf16.mxu0 %v114
    %1035 = vmatmul.mubr.bf16.gmra.mxu0 %v113
    %v1036 = vpop.f32.mrf.mxu0
    %v1037 = vadd.f32 %v964, %v1036
    %v1038 = vpop.f32.mrf.mxu0
    %v1039 = vadd.f32 %v966, %v1038
    %v1040 = vpop.f32.mrf.mxu0
    %v1041 = vadd.f32 %v968, %v1040
    %v1042 = vpop.f32.mrf.mxu0
    %v1043 = vadd.f32 %v970, %v1042
    %1044 = vmatprep.mubr.bf16.mxu0 %v118
    %1045 = vmatmul.mubr.bf16.gmra.mxu0 %v117
    %v1046 = vpop.f32.mrf.mxu0
    %v1047 = vadd.f32 %v974, %v1046
    %v1048 = vpop.f32.mrf.mxu0
    %v1049 = vadd.f32 %v976, %v1048
    %v1050 = vpop.f32.mrf.mxu0
    %v1051 = vadd.f32 %v978, %v1050
    %v1052 = vpop.f32.mrf.mxu0
    %v1053 = vadd.f32 %v980, %v1052
    %1054 = vdwg.mxu0
    %1055 = vmatprep.subr.bf16.mxu0 %v684
    %1056 = vmatpush1.bf16.msra.mxu0 %v683
    %1057 = vmatprep.subr.bf16.mxu0 %v680
    %1058 = vmatpush1.bf16.msra.mxu0 %v679
    %1059 = vmatprep.subr.bf16.mxu0 %v676
    %1060 = vmatpush1.bf16.msra.mxu0 %v675
    %1061 = vmatprep.subr.bf16.mxu0 %v672
    %1062 = vmatpush1.bf16.msra.mxu0 %v671
    %1063 = vmatprep.subr.bf16.mxu0 %v668
    %1064 = vmatpush1.bf16.msra.mxu0 %v667
    %1065 = vmatprep.subr.bf16.mxu0 %v664
    %1066 = vmatpush1.bf16.msra.mxu0 %v663
    %1067 = vmatprep.subr.bf16.mxu0 %v660
    %1068 = vmatpush1.bf16.msra.mxu0 %v659
    %1069 = vmatprep.subr.bf16.mxu0 %v656
    %1070 = vmatpush1.bf16.msra.mxu0 %v655
    %1071 = vmatprep.subr.bf16.mxu0 %v716
    %1072 = vmatpush2.bf16.msra.mxu0 %v715
    %1073 = vmatprep.subr.bf16.mxu0 %v712
    %1074 = vmatpush2.bf16.msra.mxu0 %v711
    %1075 = vmatprep.subr.bf16.mxu0 %v708
    %1076 = vmatpush2.bf16.msra.mxu0 %v707
    %1077 = vmatprep.subr.bf16.mxu0 %v704
    %1078 = vmatpush2.bf16.msra.mxu0 %v703
    %1079 = vmatprep.subr.bf16.mxu0 %v700
    %1080 = vmatpush2.bf16.msra.mxu0 %v699
    %1081 = vmatprep.subr.bf16.mxu0 %v696
    %1082 = vmatpush2.bf16.msra.mxu0 %v695
    %1083 = vmatprep.subr.bf16.mxu0 %v692
    %1084 = vmatpush2.bf16.msra.mxu0 %v691
    %1085 = vmatprep.subr.bf16.mxu0 %v688
    %1086 = vmatpush2.bf16.msra.mxu0 %v687
    %1087 = vmatprep.mubr.bf16.mxu0 %v104
    %1088 = vmatmul.mubr.bf16.gmra.mxu0 %v103
    %v1089 = vpop.f32.mrf.mxu0
    %v1090 = vadd.f32 %v260, %v1089
    %v1091 = vpop.f32.mrf.mxu0
    %v1092 = vadd.f32 %v264, %v1091
    %v1093 = vpop.f32.mrf.mxu0
    %v1094 = vadd.f32 %v260, %v1093
    %v1095 = vpop.f32.mrf.mxu0
    %v1096 = vadd.f32 %v264, %v1095
    %1097 = vmatprep.mubr.bf16.mxu0 %v108
    %1098 = vmatmul.mubr.bf16.gmra.mxu0 %v107
    %v1099 = vpop.f32.mrf.mxu0
    %v1100 = vadd.f32 %v260, %v1099
    %v1101 = vpop.f32.mrf.mxu0
    %v1102 = vadd.f32 %v264, %v1101
    %v1103 = vpop.f32.mrf.mxu0
    %v1104 = vadd.f32 %v260, %v1103
    %v1105 = vpop.f32.mrf.mxu0
    %v1106 = vadd.f32 %v264, %v1105
    %1107 = vmatprep.mubr.bf16.mxu0 %v112
    %1108 = vmatmul.mubr.bf16.gmra.mxu0 %v111
    %v1109 = vpop.f32.mrf.mxu0
    %v1110 = vadd.f32 %v260, %v1109
    %v1111 = vpop.f32.mrf.mxu0
    %v1112 = vadd.f32 %v264, %v1111
    %v1113 = vpop.f32.mrf.mxu0
    %v1114 = vadd.f32 %v260, %v1113
    %v1115 = vpop.f32.mrf.mxu0
    %v1116 = vadd.f32 %v264, %v1115
    %1117 = vmatprep.mubr.bf16.mxu0 %v116
    %1118 = vmatmul.mubr.bf16.gmra.mxu0 %v115
    %v1119 = vpop.f32.mrf.mxu0
    %v1120 = vadd.f32 %v260, %v1119
    %v1121 = vpop.f32.mrf.mxu0
    %v1122 = vadd.f32 %v264, %v1121
    %v1123 = vpop.f32.mrf.mxu0
    %v1124 = vadd.f32 %v260, %v1123
    %v1125 = vpop.f32.mrf.mxu0
    %v1126 = vadd.f32 %v264, %v1125
    %1127 = vdwg.mxu0
    %1128 = vmatprep.subr.bf16.mxu0 %v748
    %1129 = vmatpush1.bf16.msra.mxu0 %v747
    %1130 = vmatprep.subr.bf16.mxu0 %v744
    %1131 = vmatpush1.bf16.msra.mxu0 %v743
    %1132 = vmatprep.subr.bf16.mxu0 %v740
    %1133 = vmatpush1.bf16.msra.mxu0 %v739
    %1134 = vmatprep.subr.bf16.mxu0 %v736
    %1135 = vmatpush1.bf16.msra.mxu0 %v735
    %1136 = vmatprep.subr.bf16.mxu0 %v732
    %1137 = vmatpush1.bf16.msra.mxu0 %v731
    %1138 = vmatprep.subr.bf16.mxu0 %v728
    %1139 = vmatpush1.bf16.msra.mxu0 %v727
    %1140 = vmatprep.subr.bf16.mxu0 %v724
    %1141 = vmatpush1.bf16.msra.mxu0 %v723
    %1142 = vmatprep.subr.bf16.mxu0 %v720
    %1143 = vmatpush1.bf16.msra.mxu0 %v719
    %1144 = vmatprep.subr.bf16.mxu0 %v780
    %1145 = vmatpush2.bf16.msra.mxu0 %v779
    %1146 = vmatprep.subr.bf16.mxu0 %v776
    %1147 = vmatpush2.bf16.msra.mxu0 %v775
    %1148 = vmatprep.subr.bf16.mxu0 %v772
    %1149 = vmatpush2.bf16.msra.mxu0 %v771
    %1150 = vmatprep.subr.bf16.mxu0 %v768
    %1151 = vmatpush2.bf16.msra.mxu0 %v767
    %1152 = vmatprep.subr.bf16.mxu0 %v764
    %1153 = vmatpush2.bf16.msra.mxu0 %v763
    %1154 = vmatprep.subr.bf16.mxu0 %v760
    %1155 = vmatpush2.bf16.msra.mxu0 %v759
    %1156 = vmatprep.subr.bf16.mxu0 %v756
    %1157 = vmatpush2.bf16.msra.mxu0 %v755
    %1158 = vmatprep.subr.bf16.mxu0 %v752
    %1159 = vmatpush2.bf16.msra.mxu0 %v751
    %1160 = vmatprep.mubr.bf16.mxu0 %v106
    %1161 = vmatmul.mubr.bf16.gmra.mxu0 %v105
    %v1162 = vpop.f32.mrf.mxu0
    %v1163 = vadd.f32 %v1090, %v1162
    %v1164 = vpop.f32.mrf.mxu0
    %v1165 = vadd.f32 %v1092, %v1164
    %v1166 = vpop.f32.mrf.mxu0
    %v1167 = vadd.f32 %v1094, %v1166
    %v1168 = vpop.f32.mrf.mxu0
    %v1169 = vadd.f32 %v1096, %v1168
    %1170 = vmatprep.mubr.bf16.mxu0 %v110
    %1171 = vmatmul.mubr.bf16.gmra.mxu0 %v109
    %v1172 = vpop.f32.mrf.mxu0
    %v1173 = vadd.f32 %v1100, %v1172
    %v1174 = vpop.f32.mrf.mxu0
    %v1175 = vadd.f32 %v1102, %v1174
    %v1176 = vpop.f32.mrf.mxu0
    %v1177 = vadd.f32 %v1104, %v1176
    %v1178 = vpop.f32.mrf.mxu0
    %v1179 = vadd.f32 %v1106, %v1178
    %1180 = vmatprep.mubr.bf16.mxu0 %v114
    %1181 = vmatmul.mubr.bf16.gmra.mxu0 %v113
    %v1182 = vpop.f32.mrf.mxu0
    %v1183 = vadd.f32 %v1110, %v1182
    %v1184 = vpop.f32.mrf.mxu0
    %v1185 = vadd.f32 %v1112, %v1184
    %v1186 = vpop.f32.mrf.mxu0
    %v1187 = vadd.f32 %v1114, %v1186
    %v1188 = vpop.f32.mrf.mxu0
    %v1189 = vadd.f32 %v1116, %v1188
    %1190 = vmatprep.mubr.bf16.mxu0 %v118
    %1191 = vmatmul.mubr.bf16.gmra.mxu0 %v117
    %v1192 = vpop.f32.mrf.mxu0
    %v1193 = vadd.f32 %v1120, %v1192
    %v1194 = vpop.f32.mrf.mxu0
    %v1195 = vadd.f32 %v1122, %v1194
    %v1196 = vpop.f32.mrf.mxu0
    %v1197 = vadd.f32 %v1124, %v1196
    %v1198 = vpop.f32.mrf.mxu0
    %v1199 = vadd.f32 %v1126, %v1198
    %1200 = vdwg.mxu0
    %v1201 = vmax.f32 %v1017, 0.0
    %v1202 = vmax.f32 %v1019, 0.0
    %v1203 = vmax.f32 %v1163, 0.0
    %v1204 = vmax.f32 %v1165, 0.0
    %v1205 = vmax.f32 %v1021, 0.0
    %v1206 = vmax.f32 %v1023, 0.0
    %v1207 = vmax.f32 %v1167, 0.0
    %v1208 = vmax.f32 %v1169, 0.0
    %v1209 = vmax.f32 %v1027, 0.0
    %v1210 = vmax.f32 %v1029, 0.0
    %v1211 = vmax.f32 %v1173, 0.0
    %v1212 = vmax.f32 %v1175, 0.0
    %v1213 = vmax.f32 %v1031, 0.0
    %v1214 = vmax.f32 %v1033, 0.0
    %v1215 = vmax.f32 %v1177, 0.0
    %v1216 = vmax.f32 %v1179, 0.0
    %v1217 = vmax.f32 %v1037, 0.0
    %v1218 = vmax.f32 %v1039, 0.0
    %v1219 = vmax.f32 %v1183, 0.0
    %v1220 = vmax.f32 %v1185, 0.0
    %v1221 = vmax.f32 %v1041, 0.0
    %v1222 = vmax.f32 %v1043, 0.0
    %v1223 = vmax.f32 %v1187, 0.0
    %v1224 = vmax.f32 %v1189, 0.0
    %v1225 = vmax.f32 %v1047, 0.0
    %v1226 = vmax.f32 %v1049, 0.0
    %v1227 = vmax.f32 %v1193, 0.0
    %v1228 = vmax.f32 %v1195, 0.0
    %v1229 = vmax.f32 %v1051, 0.0
    %v1230 = vmax.f32 %v1053, 0.0
    %v1231 = vmax.f32 %v1197, 0.0
    %v1232 = vmax.f32 %v1199, 0.0
    %v1233 = vpack.c.bf16 %v1205, %v1201
    %v1234 = vpack.c.bf16 %v1206, %v1202
    %v1235 = vpack.c.bf16 %v1207, %v1203
    %v1236 = vpack.c.bf16 %v1208, %v1204
    %v1237 = vpack.c.bf16 %v1213, %v1209
    %v1238 = vpack.c.bf16 %v1214, %v1210
    %v1239 = vpack.c.bf16 %v1215, %v1211
    %v1240 = vpack.c.bf16 %v1216, %v1212
    %v1241 = vpack.c.bf16 %v1221, %v1217
    %v1242 = vpack.c.bf16 %v1222, %v1218
    %v1243 = vpack.c.bf16 %v1223, %v1219
    %v1244 = vpack.c.bf16 %v1224, %v1220
    %v1245 = vpack.c.bf16 %v1229, %v1225
    %v1246 = vpack.c.bf16 %v1230, %v1226
    %v1247 = vpack.c.bf16 %v1231, %v1227
    %v1248 = vpack.c.bf16 %v1232, %v1228
    %v1249 = vld [vmem:[#allocation8] sm:$0xff]
    %v1250 = vld [vmem:[#allocation8 + $0x8] sm:$0xff]
    %v1251 = vld [vmem:[#allocation8 + $0x10] sm:$0xff]
    %v1252 = vld [vmem:[#allocation8 + $0x18] sm:$0xff]
    %v1253 = vld [vmem:[#allocation8 + $0x20] sm:$0xff]
    %v1254 = vld [vmem:[#allocation8 + $0x28] sm:$0xff]
    %v1255 = vld [vmem:[#allocation8 + $0x30] sm:$0xff]
    %v1256 = vld [vmem:[#allocation8 + $0x38] sm:$0xff]
    %v1257 = vld [vmem:[#allocation8 + $0x40] sm:$0xff]
    %v1258 = vld [vmem:[#allocation8 + $0x48] sm:$0xff]
    %v1259 = vld [vmem:[#allocation8 + $0x50] sm:$0xff]
    %v1260 = vld [vmem:[#allocation8 + $0x58] sm:$0xff]
    %v1261 = vld [vmem:[#allocation8 + $0x60] sm:$0xff]
    %v1262 = vld [vmem:[#allocation8 + $0x68] sm:$0xff]
    %v1263 = vld [vmem:[#allocation8 + $0x70] sm:$0xff]
    %v1264 = vld [vmem:[#allocation8 + $0x78] sm:$0xff]
    %v1265 = vld [vmem:[#allocation8 + $0x80] sm:$0xff]
    %v1266 = vld [vmem:[#allocation8 + $0x88] sm:$0xff]
    %v1267 = vld [vmem:[#allocation8 + $0x90] sm:$0xff]
    %v1268 = vld [vmem:[#allocation8 + $0x98] sm:$0xff]
    %v1269 = vld [vmem:[#allocation8 + $0xa0] sm:$0xff]
    %v1270 = vld [vmem:[#allocation8 + $0xa8] sm:$0xff]
    %v1271 = vld [vmem:[#allocation8 + $0xb0] sm:$0xff]
    %v1272 = vld [vmem:[#allocation8 + $0xb8] sm:$0xff]
    %v1273 = vld [vmem:[#allocation8 + $0xc0] sm:$0xff]
    %v1274 = vld [vmem:[#allocation8 + $0xc8] sm:$0xff]
    %v1275 = vld [vmem:[#allocation8 + $0xd0] sm:$0xff]
    %v1276 = vld [vmem:[#allocation8 + $0xd8] sm:$0xff]
    %v1277 = vld [vmem:[#allocation8 + $0xe0] sm:$0xff]
    %v1278 = vld [vmem:[#allocation8 + $0xe8] sm:$0xff]
    %v1279 = vld [vmem:[#allocation8 + $0xf0] sm:$0xff]
    %v1280 = vld [vmem:[#allocation8 + $0xf8] sm:$0xff]
    %v1281 = vld [vmem:[#allocation8 + $0x100] sm:$0xff]
    %v1282 = vld [vmem:[#allocation8 + $0x108] sm:$0xff]
    %v1283 = vld [vmem:[#allocation8 + $0x110] sm:$0xff]
    %v1284 = vld [vmem:[#allocation8 + $0x118] sm:$0xff]
    %v1285 = vld [vmem:[#allocation8 + $0x120] sm:$0xff]
    %v1286 = vld [vmem:[#allocation8 + $0x128] sm:$0xff]
    %v1287 = vld [vmem:[#allocation8 + $0x130] sm:$0xff]
    %v1288 = vld [vmem:[#allocation8 + $0x138] sm:$0xff]
    %v1289 = vld [vmem:[#allocation8 + $0x140] sm:$0xff]
    %v1290 = vld [vmem:[#allocation8 + $0x148] sm:$0xff]
    %v1291 = vld [vmem:[#allocation8 + $0x150] sm:$0xff]
    %v1292 = vld [vmem:[#allocation8 + $0x158] sm:$0xff]
    %v1293 = vld [vmem:[#allocation8 + $0x160] sm:$0xff]
    %v1294 = vld [vmem:[#allocation8 + $0x168] sm:$0xff]
    %v1295 = vld [vmem:[#allocation8 + $0x170] sm:$0xff]
    %v1296 = vld [vmem:[#allocation8 + $0x178] sm:$0xff]
    %v1297 = vld [vmem:[#allocation8 + $0x180] sm:$0xff]
    %v1298 = vld [vmem:[#allocation8 + $0x188] sm:$0xff]
    %v1299 = vld [vmem:[#allocation8 + $0x190] sm:$0xff]
    %v1300 = vld [vmem:[#allocation8 + $0x198] sm:$0xff]
    %v1301 = vld [vmem:[#allocation8 + $0x1a0] sm:$0xff]
    %v1302 = vld [vmem:[#allocation8 + $0x1a8] sm:$0xff]
    %v1303 = vld [vmem:[#allocation8 + $0x1b0] sm:$0xff]
    %v1304 = vld [vmem:[#allocation8 + $0x1b8] sm:$0xff]
    %v1305 = vld [vmem:[#allocation8 + $0x1c0] sm:$0xff]
    %v1306 = vld [vmem:[#allocation8 + $0x1c8] sm:$0xff]
    %v1307 = vld [vmem:[#allocation8 + $0x1d0] sm:$0xff]
    %v1308 = vld [vmem:[#allocation8 + $0x1d8] sm:$0xff]
    %v1309 = vld [vmem:[#allocation8 + $0x1e0] sm:$0xff]
    %v1310 = vld [vmem:[#allocation8 + $0x1e8] sm:$0xff]
    %v1311 = vld [vmem:[#allocation8 + $0x1f0] sm:$0xff]
    %v1312 = vld [vmem:[#allocation8 + $0x1f8] sm:$0xff]
    %v1313 = vld [vmem:[#allocation8 + $0x200] sm:$0xff]
    %v1314 = vld [vmem:[#allocation8 + $0x208] sm:$0xff]
    %v1315 = vld [vmem:[#allocation8 + $0x210] sm:$0xff]
    %v1316 = vld [vmem:[#allocation8 + $0x218] sm:$0xff]
    %v1317 = vld [vmem:[#allocation8 + $0x220] sm:$0xff]
    %v1318 = vld [vmem:[#allocation8 + $0x228] sm:$0xff]
    %v1319 = vld [vmem:[#allocation8 + $0x230] sm:$0xff]
    %v1320 = vld [vmem:[#allocation8 + $0x238] sm:$0xff]
    %v1321 = vld [vmem:[#allocation8 + $0x240] sm:$0xff]
    %v1322 = vld [vmem:[#allocation8 + $0x248] sm:$0xff]
    %v1323 = vld [vmem:[#allocation8 + $0x250] sm:$0xff]
    %v1324 = vld [vmem:[#allocation8 + $0x258] sm:$0xff]
    %v1325 = vld [vmem:[#allocation8 + $0x260] sm:$0xff]
    %v1326 = vld [vmem:[#allocation8 + $0x268] sm:$0xff]
    %v1327 = vld [vmem:[#allocation8 + $0x270] sm:$0xff]
    %v1328 = vld [vmem:[#allocation8 + $0x278] sm:$0xff]
    %v1329 = vld [vmem:[#allocation8 + $0x280] sm:$0xff]
    %v1330 = vld [vmem:[#allocation8 + $0x288] sm:$0xff]
    %v1331 = vld [vmem:[#allocation8 + $0x290] sm:$0xff]
    %v1332 = vld [vmem:[#allocation8 + $0x298] sm:$0xff]
    %v1333 = vld [vmem:[#allocation8 + $0x2a0] sm:$0xff]
    %v1334 = vld [vmem:[#allocation8 + $0x2a8] sm:$0xff]
    %v1335 = vld [vmem:[#allocation8 + $0x2b0] sm:$0xff]
    %v1336 = vld [vmem:[#allocation8 + $0x2b8] sm:$0xff]
    %v1337 = vld [vmem:[#allocation8 + $0x2c0] sm:$0xff]
    %v1338 = vld [vmem:[#allocation8 + $0x2c8] sm:$0xff]
    %v1339 = vld [vmem:[#allocation8 + $0x2d0] sm:$0xff]
    %v1340 = vld [vmem:[#allocation8 + $0x2d8] sm:$0xff]
    %v1341 = vld [vmem:[#allocation8 + $0x2e0] sm:$0xff]
    %v1342 = vld [vmem:[#allocation8 + $0x2e8] sm:$0xff]
    %v1343 = vld [vmem:[#allocation8 + $0x2f0] sm:$0xff]
    %v1344 = vld [vmem:[#allocation8 + $0x2f8] sm:$0xff]
    %v1345 = vld [vmem:[#allocation8 + $0x300] sm:$0xff]
    %v1346 = vld [vmem:[#allocation8 + $0x308] sm:$0xff]
    %v1347 = vld [vmem:[#allocation8 + $0x310] sm:$0xff]
    %v1348 = vld [vmem:[#allocation8 + $0x318] sm:$0xff]
    %v1349 = vld [vmem:[#allocation8 + $0x320] sm:$0xff]
    %v1350 = vld [vmem:[#allocation8 + $0x328] sm:$0xff]
    %v1351 = vld [vmem:[#allocation8 + $0x330] sm:$0xff]
    %v1352 = vld [vmem:[#allocation8 + $0x338] sm:$0xff]
    %v1353 = vld [vmem:[#allocation8 + $0x340] sm:$0xff]
    %v1354 = vld [vmem:[#allocation8 + $0x348] sm:$0xff]
    %v1355 = vld [vmem:[#allocation8 + $0x350] sm:$0xff]
    %v1356 = vld [vmem:[#allocation8 + $0x358] sm:$0xff]
    %v1357 = vld [vmem:[#allocation8 + $0x360] sm:$0xff]
    %v1358 = vld [vmem:[#allocation8 + $0x368] sm:$0xff]
    %v1359 = vld [vmem:[#allocation8 + $0x370] sm:$0xff]
    %v1360 = vld [vmem:[#allocation8 + $0x378] sm:$0xff]
    %v1361 = vld [vmem:[#allocation8 + $0x380] sm:$0xff]
    %v1362 = vld [vmem:[#allocation8 + $0x388] sm:$0xff]
    %v1363 = vld [vmem:[#allocation8 + $0x390] sm:$0xff]
    %v1364 = vld [vmem:[#allocation8 + $0x398] sm:$0xff]
    %v1365 = vld [vmem:[#allocation8 + $0x3a0] sm:$0xff]
    %v1366 = vld [vmem:[#allocation8 + $0x3a8] sm:$0xff]
    %v1367 = vld [vmem:[#allocation8 + $0x3b0] sm:$0xff]
    %v1368 = vld [vmem:[#allocation8 + $0x3b8] sm:$0xff]
    %v1369 = vld [vmem:[#allocation8 + $0x3c0] sm:$0xff]
    %v1370 = vld [vmem:[#allocation8 + $0x3c8] sm:$0xff]
    %v1371 = vld [vmem:[#allocation8 + $0x3d0] sm:$0xff]
    %v1372 = vld [vmem:[#allocation8 + $0x3d8] sm:$0xff]
    %v1373 = vld [vmem:[#allocation8 + $0x3e0] sm:$0xff]
    %v1374 = vld [vmem:[#allocation8 + $0x3e8] sm:$0xff]
    %v1375 = vld [vmem:[#allocation8 + $0x3f0] sm:$0xff]
    %v1376 = vld [vmem:[#allocation8 + $0x3f8] sm:$0xff]
    %v1505 = vunpack.c.l.b16 %v1249
    %v1506 = vunpack.c.h.b16 %v1249
    %v1507 = vunpack.c.l.b16 %v1250
    %v1508 = vunpack.c.h.b16 %v1250
    %v1509 = vunpack.c.l.b16 %v1251
    %v1510 = vunpack.c.h.b16 %v1251
    %v1511 = vunpack.c.l.b16 %v1252
    %v1512 = vunpack.c.h.b16 %v1252
    %v1513 = vunpack.c.l.b16 %v1253
    %v1514 = vunpack.c.h.b16 %v1253
    %v1515 = vunpack.c.l.b16 %v1254
    %v1516 = vunpack.c.h.b16 %v1254
    %v1517 = vunpack.c.l.b16 %v1255
    %v1518 = vunpack.c.h.b16 %v1255
    %v1519 = vunpack.c.l.b16 %v1256
    %v1520 = vunpack.c.h.b16 %v1256
    %v1521 = vunpack.c.l.b16 %v1257
    %v1522 = vunpack.c.h.b16 %v1257
    %v1523 = vunpack.c.l.b16 %v1258
    %v1524 = vunpack.c.h.b16 %v1258
    %v1525 = vunpack.c.l.b16 %v1259
    %v1526 = vunpack.c.h.b16 %v1259
    %v1527 = vunpack.c.l.b16 %v1260
    %v1528 = vunpack.c.h.b16 %v1260
    %v1529 = vunpack.c.l.b16 %v1261
    %v1530 = vunpack.c.h.b16 %v1261
    %v1531 = vunpack.c.l.b16 %v1262
    %v1532 = vunpack.c.h.b16 %v1262
    %v1533 = vunpack.c.l.b16 %v1263
    %v1534 = vunpack.c.h.b16 %v1263
    %v1535 = vunpack.c.l.b16 %v1264
    %v1536 = vunpack.c.h.b16 %v1264
    %v1537 = vunpack.c.l.b16 %v1265
    %v1538 = vunpack.c.h.b16 %v1265
    %v1539 = vunpack.c.l.b16 %v1266
    %v1540 = vunpack.c.h.b16 %v1266
    %v1541 = vunpack.c.l.b16 %v1267
    %v1542 = vunpack.c.h.b16 %v1267
    %v1543 = vunpack.c.l.b16 %v1268
    %v1544 = vunpack.c.h.b16 %v1268
    %v1545 = vunpack.c.l.b16 %v1269
    %v1546 = vunpack.c.h.b16 %v1269
    %v1547 = vunpack.c.l.b16 %v1270
    %v1548 = vunpack.c.h.b16 %v1270
    %v1549 = vunpack.c.l.b16 %v1271
    %v1550 = vunpack.c.h.b16 %v1271
    %v1551 = vunpack.c.l.b16 %v1272
    %v1552 = vunpack.c.h.b16 %v1272
    %v1553 = vunpack.c.l.b16 %v1273
    %v1554 = vunpack.c.h.b16 %v1273
    %v1555 = vunpack.c.l.b16 %v1274
    %v1556 = vunpack.c.h.b16 %v1274
    %v1557 = vunpack.c.l.b16 %v1275
    %v1558 = vunpack.c.h.b16 %v1275
    %v1559 = vunpack.c.l.b16 %v1276
    %v1560 = vunpack.c.h.b16 %v1276
    %v1561 = vunpack.c.l.b16 %v1277
    %v1562 = vunpack.c.h.b16 %v1277
    %v1563 = vunpack.c.l.b16 %v1278
    %v1564 = vunpack.c.h.b16 %v1278
    %v1565 = vunpack.c.l.b16 %v1279
    %v1566 = vunpack.c.h.b16 %v1279
    %v1567 = vunpack.c.l.b16 %v1280
    %v1568 = vunpack.c.h.b16 %v1280
    %v1569 = vunpack.c.l.b16 %v1281
    %v1570 = vunpack.c.h.b16 %v1281
    %v1571 = vunpack.c.l.b16 %v1282
    %v1572 = vunpack.c.h.b16 %v1282
    %v1573 = vunpack.c.l.b16 %v1283
    %v1574 = vunpack.c.h.b16 %v1283
    %v1575 = vunpack.c.l.b16 %v1284
    %v1576 = vunpack.c.h.b16 %v1284
    %v1577 = vunpack.c.l.b16 %v1285
    %v1578 = vunpack.c.h.b16 %v1285
    %v1579 = vunpack.c.l.b16 %v1286
    %v1580 = vunpack.c.h.b16 %v1286
    %v1581 = vunpack.c.l.b16 %v1287
    %v1582 = vunpack.c.h.b16 %v1287
    %v1583 = vunpack.c.l.b16 %v1288
    %v1584 = vunpack.c.h.b16 %v1288
    %v1585 = vunpack.c.l.b16 %v1289
    %v1586 = vunpack.c.h.b16 %v1289
    %v1587 = vunpack.c.l.b16 %v1290
    %v1588 = vunpack.c.h.b16 %v1290
    %v1589 = vunpack.c.l.b16 %v1291
    %v1590 = vunpack.c.h.b16 %v1291
    %v1591 = vunpack.c.l.b16 %v1292
    %v1592 = vunpack.c.h.b16 %v1292
    %v1593 = vunpack.c.l.b16 %v1293
    %v1594 = vunpack.c.h.b16 %v1293
    %v1595 = vunpack.c.l.b16 %v1294
    %v1596 = vunpack.c.h.b16 %v1294
    %v1597 = vunpack.c.l.b16 %v1295
    %v1598 = vunpack.c.h.b16 %v1295
    %v1599 = vunpack.c.l.b16 %v1296
    %v1600 = vunpack.c.h.b16 %v1296
    %v1601 = vunpack.c.l.b16 %v1297
    %v1602 = vunpack.c.h.b16 %v1297
    %v1603 = vunpack.c.l.b16 %v1298
    %v1604 = vunpack.c.h.b16 %v1298
    %v1605 = vunpack.c.l.b16 %v1299
    %v1606 = vunpack.c.h.b16 %v1299
    %v1607 = vunpack.c.l.b16 %v1300
    %v1608 = vunpack.c.h.b16 %v1300
    %v1609 = vunpack.c.l.b16 %v1301
    %v1610 = vunpack.c.h.b16 %v1301
    %v1611 = vunpack.c.l.b16 %v1302
    %v1612 = vunpack.c.h.b16 %v1302
    %v1613 = vunpack.c.l.b16 %v1303
    %v1614 = vunpack.c.h.b16 %v1303
    %v1615 = vunpack.c.l.b16 %v1304
    %v1616 = vunpack.c.h.b16 %v1304
    %v1617 = vunpack.c.l.b16 %v1305
    %v1618 = vunpack.c.h.b16 %v1305
    %v1619 = vunpack.c.l.b16 %v1306
    %v1620 = vunpack.c.h.b16 %v1306
    %v1621 = vunpack.c.l.b16 %v1307
    %v1622 = vunpack.c.h.b16 %v1307
    %v1623 = vunpack.c.l.b16 %v1308
    %v1624 = vunpack.c.h.b16 %v1308
    %v1625 = vunpack.c.l.b16 %v1309
    %v1626 = vunpack.c.h.b16 %v1309
    %v1627 = vunpack.c.l.b16 %v1310
    %v1628 = vunpack.c.h.b16 %v1310
    %v1629 = vunpack.c.l.b16 %v1311
    %v1630 = vunpack.c.h.b16 %v1311
    %v1631 = vunpack.c.l.b16 %v1312
    %v1632 = vunpack.c.h.b16 %v1312
    %v1633 = vunpack.c.l.b16 %v1313
    %v1634 = vunpack.c.h.b16 %v1313
    %v1635 = vunpack.c.l.b16 %v1314
    %v1636 = vunpack.c.h.b16 %v1314
    %v1637 = vunpack.c.l.b16 %v1315
    %v1638 = vunpack.c.h.b16 %v1315
    %v1639 = vunpack.c.l.b16 %v1316
    %v1640 = vunpack.c.h.b16 %v1316
    %v1641 = vunpack.c.l.b16 %v1317
    %v1642 = vunpack.c.h.b16 %v1317
    %v1643 = vunpack.c.l.b16 %v1318
    %v1644 = vunpack.c.h.b16 %v1318
    %v1645 = vunpack.c.l.b16 %v1319
    %v1646 = vunpack.c.h.b16 %v1319
    %v1647 = vunpack.c.l.b16 %v1320
    %v1648 = vunpack.c.h.b16 %v1320
    %v1649 = vunpack.c.l.b16 %v1321
    %v1650 = vunpack.c.h.b16 %v1321
    %v1651 = vunpack.c.l.b16 %v1322
    %v1652 = vunpack.c.h.b16 %v1322
    %v1653 = vunpack.c.l.b16 %v1323
    %v1654 = vunpack.c.h.b16 %v1323
    %v1655 = vunpack.c.l.b16 %v1324
    %v1656 = vunpack.c.h.b16 %v1324
    %v1657 = vunpack.c.l.b16 %v1325
    %v1658 = vunpack.c.h.b16 %v1325
    %v1659 = vunpack.c.l.b16 %v1326
    %v1660 = vunpack.c.h.b16 %v1326
    %v1661 = vunpack.c.l.b16 %v1327
    %v1662 = vunpack.c.h.b16 %v1327
    %v1663 = vunpack.c.l.b16 %v1328
    %v1664 = vunpack.c.h.b16 %v1328
    %v1665 = vunpack.c.l.b16 %v1329
    %v1666 = vunpack.c.h.b16 %v1329
    %v1667 = vunpack.c.l.b16 %v1330
    %v1668 = vunpack.c.h.b16 %v1330
    %v1669 = vunpack.c.l.b16 %v1331
    %v1670 = vunpack.c.h.b16 %v1331
    %v1671 = vunpack.c.l.b16 %v1332
    %v1672 = vunpack.c.h.b16 %v1332
    %v1673 = vunpack.c.l.b16 %v1333
    %v1674 = vunpack.c.h.b16 %v1333
    %v1675 = vunpack.c.l.b16 %v1334
    %v1676 = vunpack.c.h.b16 %v1334
    %v1677 = vunpack.c.l.b16 %v1335
    %v1678 = vunpack.c.h.b16 %v1335
    %v1679 = vunpack.c.l.b16 %v1336
    %v1680 = vunpack.c.h.b16 %v1336
    %v1681 = vunpack.c.l.b16 %v1337
    %v1682 = vunpack.c.h.b16 %v1337
    %v1683 = vunpack.c.l.b16 %v1338
    %v1684 = vunpack.c.h.b16 %v1338
    %v1685 = vunpack.c.l.b16 %v1339
    %v1686 = vunpack.c.h.b16 %v1339
    %v1687 = vunpack.c.l.b16 %v1340
    %v1688 = vunpack.c.h.b16 %v1340
    %v1689 = vunpack.c.l.b16 %v1341
    %v1690 = vunpack.c.h.b16 %v1341
    %v1691 = vunpack.c.l.b16 %v1342
    %v1692 = vunpack.c.h.b16 %v1342
    %v1693 = vunpack.c.l.b16 %v1343
    %v1694 = vunpack.c.h.b16 %v1343
    %v1695 = vunpack.c.l.b16 %v1344
    %v1696 = vunpack.c.h.b16 %v1344
    %v1697 = vunpack.c.l.b16 %v1345
    %v1698 = vunpack.c.h.b16 %v1345
    %v1699 = vunpack.c.l.b16 %v1346
    %v1700 = vunpack.c.h.b16 %v1346
    %v1701 = vunpack.c.l.b16 %v1347
    %v1702 = vunpack.c.h.b16 %v1347
    %v1703 = vunpack.c.l.b16 %v1348
    %v1704 = vunpack.c.h.b16 %v1348
    %v1705 = vunpack.c.l.b16 %v1349
    %v1706 = vunpack.c.h.b16 %v1349
    %v1707 = vunpack.c.l.b16 %v1350
    %v1708 = vunpack.c.h.b16 %v1350
    %v1709 = vunpack.c.l.b16 %v1351
    %v1710 = vunpack.c.h.b16 %v1351
    %v1711 = vunpack.c.l.b16 %v1352
    %v1712 = vunpack.c.h.b16 %v1352
    %v1713 = vunpack.c.l.b16 %v1353
    %v1714 = vunpack.c.h.b16 %v1353
    %v1715 = vunpack.c.l.b16 %v1354
    %v1716 = vunpack.c.h.b16 %v1354
    %v1717 = vunpack.c.l.b16 %v1355
    %v1718 = vunpack.c.h.b16 %v1355
    %v1719 = vunpack.c.l.b16 %v1356
    %v1720 = vunpack.c.h.b16 %v1356
    %v1721 = vunpack.c.l.b16 %v1357
    %v1722 = vunpack.c.h.b16 %v1357
    %v1723 = vunpack.c.l.b16 %v1358
    %v1724 = vunpack.c.h.b16 %v1358
    %v1725 = vunpack.c.l.b16 %v1359
    %v1726 = vunpack.c.h.b16 %v1359
    %v1727 = vunpack.c.l.b16 %v1360
    %v1728 = vunpack.c.h.b16 %v1360
    %v1729 = vunpack.c.l.b16 %v1361
    %v1730 = vunpack.c.h.b16 %v1361
    %v1731 = vunpack.c.l.b16 %v1362
    %v1732 = vunpack.c.h.b16 %v1362
    %v1733 = vunpack.c.l.b16 %v1363
    %v1734 = vunpack.c.h.b16 %v1363
    %v1735 = vunpack.c.l.b16 %v1364
    %v1736 = vunpack.c.h.b16 %v1364
    %v1737 = vunpack.c.l.b16 %v1365
    %v1738 = vunpack.c.h.b16 %v1365
    %v1739 = vunpack.c.l.b16 %v1366
    %v1740 = vunpack.c.h.b16 %v1366
    %v1741 = vunpack.c.l.b16 %v1367
    %v1742 = vunpack.c.h.b16 %v1367
    %v1743 = vunpack.c.l.b16 %v1368
    %v1744 = vunpack.c.h.b16 %v1368
    %v1745 = vunpack.c.l.b16 %v1369
    %v1746 = vunpack.c.h.b16 %v1369
    %v1747 = vunpack.c.l.b16 %v1370
    %v1748 = vunpack.c.h.b16 %v1370
    %v1749 = vunpack.c.l.b16 %v1371
    %v1750 = vunpack.c.h.b16 %v1371
    %v1751 = vunpack.c.l.b16 %v1372
    %v1752 = vunpack.c.h.b16 %v1372
    %v1753 = vunpack.c.l.b16 %v1373
    %v1754 = vunpack.c.h.b16 %v1373
    %v1755 = vunpack.c.l.b16 %v1374
    %v1756 = vunpack.c.h.b16 %v1374
    %v1757 = vunpack.c.l.b16 %v1375
    %v1758 = vunpack.c.h.b16 %v1375
    %v1759 = vunpack.c.l.b16 %v1376
    %v1760 = vunpack.c.h.b16 %v1376
    %v1761 = vpack.c.b16 %v1509, %v1505
    %v1762 = vpack.c.b16 %v1510, %v1506
    %v1763 = vpack.c.b16 %v1511, %v1507
    %v1764 = vpack.c.b16 %v1512, %v1508
    %v1765 = vpack.c.b16 %v1517, %v1513
    %v1766 = vpack.c.b16 %v1518, %v1514
    %v1767 = vpack.c.b16 %v1519, %v1515
    %v1768 = vpack.c.b16 %v1520, %v1516
    %v1769 = vpack.c.b16 %v1525, %v1521
    %v1770 = vpack.c.b16 %v1526, %v1522
    %v1771 = vpack.c.b16 %v1527, %v1523
    %v1772 = vpack.c.b16 %v1528, %v1524
    %v1773 = vpack.c.b16 %v1533, %v1529
    %v1774 = vpack.c.b16 %v1534, %v1530
    %v1775 = vpack.c.b16 %v1535, %v1531
    %v1776 = vpack.c.b16 %v1536, %v1532
    %v1777 = vpack.c.b16 %v1541, %v1537
    %v1778 = vpack.c.b16 %v1542, %v1538
    %v1779 = vpack.c.b16 %v1543, %v1539
    %v1780 = vpack.c.b16 %v1544, %v1540
    %v1781 = vpack.c.b16 %v1549, %v1545
    %v1782 = vpack.c.b16 %v1550, %v1546
    %v1783 = vpack.c.b16 %v1551, %v1547
    %v1784 = vpack.c.b16 %v1552, %v1548
    %v1785 = vpack.c.b16 %v1557, %v1553
    %v1786 = vpack.c.b16 %v1558, %v1554
    %v1787 = vpack.c.b16 %v1559, %v1555
    %v1788 = vpack.c.b16 %v1560, %v1556
    %v1789 = vpack.c.b16 %v1565, %v1561
    %v1790 = vpack.c.b16 %v1566, %v1562
    %v1791 = vpack.c.b16 %v1567, %v1563
    %v1792 = vpack.c.b16 %v1568, %v1564
    %v1793 = vpack.c.b16 %v1573, %v1569
    %v1794 = vpack.c.b16 %v1574, %v1570
    %v1795 = vpack.c.b16 %v1575, %v1571
    %v1796 = vpack.c.b16 %v1576, %v1572
    %v1797 = vpack.c.b16 %v1581, %v1577
    %v1798 = vpack.c.b16 %v1582, %v1578
    %v1799 = vpack.c.b16 %v1583, %v1579
    %v1800 = vpack.c.b16 %v1584, %v1580
    %v1801 = vpack.c.b16 %v1589, %v1585
    %v1802 = vpack.c.b16 %v1590, %v1586
    %v1803 = vpack.c.b16 %v1591, %v1587
    %v1804 = vpack.c.b16 %v1592, %v1588
    %v1805 = vpack.c.b16 %v1597, %v1593
    %v1806 = vpack.c.b16 %v1598, %v1594
    %v1807 = vpack.c.b16 %v1599, %v1595
    %v1808 = vpack.c.b16 %v1600, %v1596
    %v1809 = vpack.c.b16 %v1605, %v1601
    %v1810 = vpack.c.b16 %v1606, %v1602
    %v1811 = vpack.c.b16 %v1607, %v1603
    %v1812 = vpack.c.b16 %v1608, %v1604
    %v1813 = vpack.c.b16 %v1613, %v1609
    %v1814 = vpack.c.b16 %v1614, %v1610
    %v1815 = vpack.c.b16 %v1615, %v1611
    %v1816 = vpack.c.b16 %v1616, %v1612
    %v1817 = vpack.c.b16 %v1621, %v1617
    %v1818 = vpack.c.b16 %v1622, %v1618
    %v1819 = vpack.c.b16 %v1623, %v1619
    %v1820 = vpack.c.b16 %v1624, %v1620
    %v1821 = vpack.c.b16 %v1629, %v1625
    %v1822 = vpack.c.b16 %v1630, %v1626
    %v1823 = vpack.c.b16 %v1631, %v1627
    %v1824 = vpack.c.b16 %v1632, %v1628
    %v1825 = vpack.c.b16 %v1637, %v1633
    %v1826 = vpack.c.b16 %v1638, %v1634
    %v1827 = vpack.c.b16 %v1639, %v1635
    %v1828 = vpack.c.b16 %v1640, %v1636
    %v1829 = vpack.c.b16 %v1645, %v1641
    %v1830 = vpack.c.b16 %v1646, %v1642
    %v1831 = vpack.c.b16 %v1647, %v1643
    %v1832 = vpack.c.b16 %v1648, %v1644
    %v1833 = vpack.c.b16 %v1653, %v1649
    %v1834 = vpack.c.b16 %v1654, %v1650
    %v1835 = vpack.c.b16 %v1655, %v1651
    %v1836 = vpack.c.b16 %v1656, %v1652
    %v1837 = vpack.c.b16 %v1661, %v1657
    %v1838 = vpack.c.b16 %v1662, %v1658
    %v1839 = vpack.c.b16 %v1663, %v1659
    %v1840 = vpack.c.b16 %v1664, %v1660
    %v1841 = vpack.c.b16 %v1669, %v1665
    %v1842 = vpack.c.b16 %v1670, %v1666
    %v1843 = vpack.c.b16 %v1671, %v1667
    %v1844 = vpack.c.b16 %v1672, %v1668
    %v1845 = vpack.c.b16 %v1677, %v1673
    %v1846 = vpack.c.b16 %v1678, %v1674
    %v1847 = vpack.c.b16 %v1679, %v1675
    %v1848 = vpack.c.b16 %v1680, %v1676
    %v1849 = vpack.c.b16 %v1685, %v1681
    %v1850 = vpack.c.b16 %v1686, %v1682
    %v1851 = vpack.c.b16 %v1687, %v1683
    %v1852 = vpack.c.b16 %v1688, %v1684
    %v1853 = vpack.c.b16 %v1693, %v1689
    %v1854 = vpack.c.b16 %v1694, %v1690
    %v1855 = vpack.c.b16 %v1695, %v1691
    %v1856 = vpack.c.b16 %v1696, %v1692
    %v1857 = vpack.c.b16 %v1701, %v1697
    %v1858 = vpack.c.b16 %v1702, %v1698
    %v1859 = vpack.c.b16 %v1703, %v1699
    %v1860 = vpack.c.b16 %v1704, %v1700
    %v1861 = vpack.c.b16 %v1709, %v1705
    %v1862 = vpack.c.b16 %v1710, %v1706
    %v1863 = vpack.c.b16 %v1711, %v1707
    %v1864 = vpack.c.b16 %v1712, %v1708
    %v1865 = vpack.c.b16 %v1717, %v1713
    %v1866 = vpack.c.b16 %v1718, %v1714
    %v1867 = vpack.c.b16 %v1719, %v1715
    %v1868 = vpack.c.b16 %v1720, %v1716
    %v1869 = vpack.c.b16 %v1725, %v1721
    %v1870 = vpack.c.b16 %v1726, %v1722
    %v1871 = vpack.c.b16 %v1727, %v1723
    %v1872 = vpack.c.b16 %v1728, %v1724
    %v1873 = vpack.c.b16 %v1733, %v1729
    %v1874 = vpack.c.b16 %v1734, %v1730
    %v1875 = vpack.c.b16 %v1735, %v1731
    %v1876 = vpack.c.b16 %v1736, %v1732
    %v1877 = vpack.c.b16 %v1741, %v1737
    %v1878 = vpack.c.b16 %v1742, %v1738
    %v1879 = vpack.c.b16 %v1743, %v1739
    %v1880 = vpack.c.b16 %v1744, %v1740
    %v1881 = vpack.c.b16 %v1749, %v1745
    %v1882 = vpack.c.b16 %v1750, %v1746
    %v1883 = vpack.c.b16 %v1751, %v1747
    %v1884 = vpack.c.b16 %v1752, %v1748
    %v1885 = vpack.c.b16 %v1757, %v1753
    %v1886 = vpack.c.b16 %v1758, %v1754
    %v1887 = vpack.c.b16 %v1759, %v1755
    %v1888 = vpack.c.b16 %v1760, %v1756
    %2017 = vmatprep.subr.bf16.mxu0 %v1790
    %2018 = vmatpush1.bf16.msra.mxu0 %v1789
    %2019 = vmatprep.subr.bf16.mxu0 %v1786
    %2020 = vmatpush1.bf16.msra.mxu0 %v1785
    %2021 = vmatprep.subr.bf16.mxu0 %v1782
    %2022 = vmatpush1.bf16.msra.mxu0 %v1781
    %2023 = vmatprep.subr.bf16.mxu0 %v1778
    %2024 = vmatpush1.bf16.msra.mxu0 %v1777
    %2025 = vmatprep.subr.bf16.mxu0 %v1774
    %2026 = vmatpush1.bf16.msra.mxu0 %v1773
    %2027 = vmatprep.subr.bf16.mxu0 %v1770
    %2028 = vmatpush1.bf16.msra.mxu0 %v1769
    %2029 = vmatprep.subr.bf16.mxu0 %v1766
    %2030 = vmatpush1.bf16.msra.mxu0 %v1765
    %2031 = vmatprep.subr.bf16.mxu0 %v1762
    %2032 = vmatpush1.bf16.msra.mxu0 %v1761
    %2033 = vmatprep.subr.bf16.mxu0 %v1822
    %2034 = vmatpush2.bf16.msra.mxu0 %v1821
    %2035 = vmatprep.subr.bf16.mxu0 %v1818
    %2036 = vmatpush2.bf16.msra.mxu0 %v1817
    %2037 = vmatprep.subr.bf16.mxu0 %v1814
    %2038 = vmatpush2.bf16.msra.mxu0 %v1813
    %2039 = vmatprep.subr.bf16.mxu0 %v1810
    %2040 = vmatpush2.bf16.msra.mxu0 %v1809
    %2041 = vmatprep.subr.bf16.mxu0 %v1806
    %2042 = vmatpush2.bf16.msra.mxu0 %v1805
    %2043 = vmatprep.subr.bf16.mxu0 %v1802
    %2044 = vmatpush2.bf16.msra.mxu0 %v1801
    %2045 = vmatprep.subr.bf16.mxu0 %v1798
    %2046 = vmatpush2.bf16.msra.mxu0 %v1797
    %2047 = vmatprep.subr.bf16.mxu0 %v1794
    %2048 = vmatpush2.bf16.msra.mxu0 %v1793
    %2049 = vmatprep.mubr.bf16.mxu0 %v1234
    %2050 = vmatmul.mubr.bf16.gmra.mxu0 %v1233
    %v2051 = vpop.f32.mrf.mxu0
    %v2052 = vadd.f32 0.0, %v2051
    %v2053 = vpop.f32.mrf.mxu0
    %v2054 = vadd.f32 0.0, %v2053
    %v2055 = vpop.f32.mrf.mxu0
    %v2056 = vadd.f32 0.0, %v2055
    %v2057 = vpop.f32.mrf.mxu0
    %v2058 = vadd.f32 0.0, %v2057
    %2059 = vmatprep.mubr.bf16.mxu0 %v1238
    %2060 = vmatmul.mubr.bf16.gmra.mxu0 %v1237
    %v2061 = vpop.f32.mrf.mxu0
    %v2062 = vadd.f32 0.0, %v2061
    %v2063 = vpop.f32.mrf.mxu0
    %v2064 = vadd.f32 0.0, %v2063
    %v2065 = vpop.f32.mrf.mxu0
    %v2066 = vadd.f32 0.0, %v2065
    %v2067 = vpop.f32.mrf.mxu0
    %v2068 = vadd.f32 0.0, %v2067
    %2069 = vmatprep.mubr.bf16.mxu0 %v1242
    %2070 = vmatmul.mubr.bf16.gmra.mxu0 %v1241
    %v2071 = vpop.f32.mrf.mxu0
    %v2072 = vadd.f32 0.0, %v2071
    %v2073 = vpop.f32.mrf.mxu0
    %v2074 = vadd.f32 0.0, %v2073
    %v2075 = vpop.f32.mrf.mxu0
    %v2076 = vadd.f32 0.0, %v2075
    %v2077 = vpop.f32.mrf.mxu0
    %v2078 = vadd.f32 0.0, %v2077
    %2079 = vmatprep.mubr.bf16.mxu0 %v1246
    %2080 = vmatmul.mubr.bf16.gmra.mxu0 %v1245
    %v2081 = vpop.f32.mrf.mxu0
    %v2082 = vadd.f32 0.0, %v2081
    %v2083 = vpop.f32.mrf.mxu0
    %v2084 = vadd.f32 0.0, %v2083
    %v2085 = vpop.f32.mrf.mxu0
    %v2086 = vadd.f32 0.0, %v2085
    %v2087 = vpop.f32.mrf.mxu0
    %v2088 = vadd.f32 0.0, %v2087
    %2089 = vdwg.mxu0
    %2090 = vmatprep.subr.bf16.mxu0 %v1854
    %2091 = vmatpush1.bf16.msra.mxu0 %v1853
    %2092 = vmatprep.subr.bf16.mxu0 %v1850
    %2093 = vmatpush1.bf16.msra.mxu0 %v1849
    %2094 = vmatprep.subr.bf16.mxu0 %v1846
    %2095 = vmatpush1.bf16.msra.mxu0 %v1845
    %2096 = vmatprep.subr.bf16.mxu0 %v1842
    %2097 = vmatpush1.bf16.msra.mxu0 %v1841
    %2098 = vmatprep.subr.bf16.mxu0 %v1838
    %2099 = vmatpush1.bf16.msra.mxu0 %v1837
    %2100 = vmatprep.subr.bf16.mxu0 %v1834
    %2101 = vmatpush1.bf16.msra.mxu0 %v1833
    %2102 = vmatprep.subr.bf16.mxu0 %v1830
    %2103 = vmatpush1.bf16.msra.mxu0 %v1829
    %2104 = vmatprep.subr.bf16.mxu0 %v1826
    %2105 = vmatpush1.bf16.msra.mxu0 %v1825
    %2106 = vmatprep.subr.bf16.mxu0 %v1886
    %2107 = vmatpush2.bf16.msra.mxu0 %v1885
    %2108 = vmatprep.subr.bf16.mxu0 %v1882
    %2109 = vmatpush2.bf16.msra.mxu0 %v1881
    %2110 = vmatprep.subr.bf16.mxu0 %v1878
    %2111 = vmatpush2.bf16.msra.mxu0 %v1877
    %2112 = vmatprep.subr.bf16.mxu0 %v1874
    %2113 = vmatpush2.bf16.msra.mxu0 %v1873
    %2114 = vmatprep.subr.bf16.mxu0 %v1870
    %2115 = vmatpush2.bf16.msra.mxu0 %v1869
    %2116 = vmatprep.subr.bf16.mxu0 %v1866
    %2117 = vmatpush2.bf16.msra.mxu0 %v1865
    %2118 = vmatprep.subr.bf16.mxu0 %v1862
    %2119 = vmatpush2.bf16.msra.mxu0 %v1861
    %2120 = vmatprep.subr.bf16.mxu0 %v1858
    %2121 = vmatpush2.bf16.msra.mxu0 %v1857
    %2122 = vmatprep.mubr.bf16.mxu0 %v1236
    %2123 = vmatmul.mubr.bf16.gmra.mxu0 %v1235
    %v2124 = vpop.f32.mrf.mxu0
    %v2125 = vadd.f32 %v2052, %v2124
    %v2126 = vpop.f32.mrf.mxu0
    %v2127 = vadd.f32 %v2054, %v2126
    %v2128 = vpop.f32.mrf.mxu0
    %v2129 = vadd.f32 %v2056, %v2128
    %v2130 = vpop.f32.mrf.mxu0
    %v2131 = vadd.f32 %v2058, %v2130
    %2132 = vmatprep.mubr.bf16.mxu0 %v1240
    %2133 = vmatmul.mubr.bf16.gmra.mxu0 %v1239
    %v2134 = vpop.f32.mrf.mxu0
    %v2135 = vadd.f32 %v2062, %v2134
    %v2136 = vpop.f32.mrf.mxu0
    %v2137 = vadd.f32 %v2064, %v2136
    %v2138 = vpop.f32.mrf.mxu0
    %v2139 = vadd.f32 %v2066, %v2138
    %v2140 = vpop.f32.mrf.mxu0
    %v2141 = vadd.f32 %v2068, %v2140
    %2142 = vmatprep.mubr.bf16.mxu0 %v1244
    %2143 = vmatmul.mubr.bf16.gmra.mxu0 %v1243
    %v2144 = vpop.f32.mrf.mxu0
    %v2145 = vadd.f32 %v2072, %v2144
    %v2146 = vpop.f32.mrf.mxu0
    %v2147 = vadd.f32 %v2074, %v2146
    %v2148 = vpop.f32.mrf.mxu0
    %v2149 = vadd.f32 %v2076, %v2148
    %v2150 = vpop.f32.mrf.mxu0
    %v2151 = vadd.f32 %v2078, %v2150
    %2152 = vmatprep.mubr.bf16.mxu0 %v1248
    %2153 = vmatmul.mubr.bf16.gmra.mxu0 %v1247
    %v2154 = vpop.f32.mrf.mxu0
    %v2155 = vadd.f32 %v2082, %v2154
    %v2156 = vpop.f32.mrf.mxu0
    %v2157 = vadd.f32 %v2084, %v2156
    %v2158 = vpop.f32.mrf.mxu0
    %v2159 = vadd.f32 %v2086, %v2158
    %v2160 = vpop.f32.mrf.mxu0
    %v2161 = vadd.f32 %v2088, %v2160
    %2162 = vdwg.mxu0
    %2163 = vmatprep.subr.bf16.mxu0 %v1792
    %2164 = vmatpush1.bf16.msra.mxu0 %v1791
    %2165 = vmatprep.subr.bf16.mxu0 %v1788
    %2166 = vmatpush1.bf16.msra.mxu0 %v1787
    %2167 = vmatprep.subr.bf16.mxu0 %v1784
    %2168 = vmatpush1.bf16.msra.mxu0 %v1783
    %2169 = vmatprep.subr.bf16.mxu0 %v1780
    %2170 = vmatpush1.bf16.msra.mxu0 %v1779
    %2171 = vmatprep.subr.bf16.mxu0 %v1776
    %2172 = vmatpush1.bf16.msra.mxu0 %v1775
    %2173 = vmatprep.subr.bf16.mxu0 %v1772
    %2174 = vmatpush1.bf16.msra.mxu0 %v1771
    %2175 = vmatprep.subr.bf16.mxu0 %v1768
    %2176 = vmatpush1.bf16.msra.mxu0 %v1767
    %2177 = vmatprep.subr.bf16.mxu0 %v1764
    %2178 = vmatpush1.bf16.msra.mxu0 %v1763
    %2179 = vmatprep.subr.bf16.mxu0 %v1824
    %2180 = vmatpush2.bf16.msra.mxu0 %v1823
    %2181 = vmatprep.subr.bf16.mxu0 %v1820
    %2182 = vmatpush2.bf16.msra.mxu0 %v1819
    %2183 = vmatprep.subr.bf16.mxu0 %v1816
    %2184 = vmatpush2.bf16.msra.mxu0 %v1815
    %2185 = vmatprep.subr.bf16.mxu0 %v1812
    %2186 = vmatpush2.bf16.msra.mxu0 %v1811
    %2187 = vmatprep.subr.bf16.mxu0 %v1808
    %2188 = vmatpush2.bf16.msra.mxu0 %v1807
    %2189 = vmatprep.subr.bf16.mxu0 %v1804
    %2190 = vmatpush2.bf16.msra.mxu0 %v1803
    %2191 = vmatprep.subr.bf16.mxu0 %v1800
    %2192 = vmatpush2.bf16.msra.mxu0 %v1799
    %2193 = vmatprep.subr.bf16.mxu0 %v1796
    %2194 = vmatpush2.bf16.msra.mxu0 %v1795
    %2195 = vmatprep.mubr.bf16.mxu0 %v1234
    %2196 = vmatmul.mubr.bf16.gmra.mxu0 %v1233
    %v2197 = vpop.f32.mrf.mxu0
    %v2198 = vadd.f32 0.0, %v2197
    %v2199 = vpop.f32.mrf.mxu0
    %v2200 = vadd.f32 0.0, %v2199
    %v2201 = vpop.f32.mrf.mxu0
    %v2202 = vadd.f32 0.0, %v2201
    %v2203 = vpop.f32.mrf.mxu0
    %v2204 = vadd.f32 0.0, %v2203
    %2205 = vmatprep.mubr.bf16.mxu0 %v1238
    %2206 = vmatmul.mubr.bf16.gmra.mxu0 %v1237
    %v2207 = vpop.f32.mrf.mxu0
    %v2208 = vadd.f32 0.0, %v2207
    %v2209 = vpop.f32.mrf.mxu0
    %v2210 = vadd.f32 0.0, %v2209
    %v2211 = vpop.f32.mrf.mxu0
    %v2212 = vadd.f32 0.0, %v2211
    %v2213 = vpop.f32.mrf.mxu0
    %v2214 = vadd.f32 0.0, %v2213
    %2215 = vmatprep.mubr.bf16.mxu0 %v1242
    %2216 = vmatmul.mubr.bf16.gmra.mxu0 %v1241
    %v2217 = vpop.f32.mrf.mxu0
    %v2218 = vadd.f32 0.0, %v2217
    %v2219 = vpop.f32.mrf.mxu0
    %v2220 = vadd.f32 0.0, %v2219
    %v2221 = vpop.f32.mrf.mxu0
    %v2222 = vadd.f32 0.0, %v2221
    %v2223 = vpop.f32.mrf.mxu0
    %v2224 = vadd.f32 0.0, %v2223
    %2225 = vmatprep.mubr.bf16.mxu0 %v1246
    %2226 = vmatmul.mubr.bf16.gmra.mxu0 %v1245
    %v2227 = vpop.f32.mrf.mxu0
    %v2228 = vadd.f32 0.0, %v2227
    %v2229 = vpop.f32.mrf.mxu0
    %v2230 = vadd.f32 0.0, %v2229
    %v2231 = vpop.f32.mrf.mxu0
    %v2232 = vadd.f32 0.0, %v2231
    %v2233 = vpop.f32.mrf.mxu0
    %v2234 = vadd.f32 0.0, %v2233
    %2235 = vdwg.mxu0
    %2236 = vmatprep.subr.bf16.mxu0 %v1856
    %2237 = vmatpush1.bf16.msra.mxu0 %v1855
    %2238 = vmatprep.subr.bf16.mxu0 %v1852
    %2239 = vmatpush1.bf16.msra.mxu0 %v1851
    %2240 = vmatprep.subr.bf16.mxu0 %v1848
    %2241 = vmatpush1.bf16.msra.mxu0 %v1847
    %2242 = vmatprep.subr.bf16.mxu0 %v1844
    %2243 = vmatpush1.bf16.msra.mxu0 %v1843
    %2244 = vmatprep.subr.bf16.mxu0 %v1840
    %2245 = vmatpush1.bf16.msra.mxu0 %v1839
    %2246 = vmatprep.subr.bf16.mxu0 %v1836
    %2247 = vmatpush1.bf16.msra.mxu0 %v1835
    %2248 = vmatprep.subr.bf16.mxu0 %v1832
    %2249 = vmatpush1.bf16.msra.mxu0 %v1831
    %2250 = vmatprep.subr.bf16.mxu0 %v1828
    %2251 = vmatpush1.bf16.msra.mxu0 %v1827
    %2252 = vmatprep.subr.bf16.mxu0 %v1888
    %2253 = vmatpush2.bf16.msra.mxu0 %v1887
    %2254 = vmatprep.subr.bf16.mxu0 %v1884
    %2255 = vmatpush2.bf16.msra.mxu0 %v1883
    %2256 = vmatprep.subr.bf16.mxu0 %v1880
    %2257 = vmatpush2.bf16.msra.mxu0 %v1879
    %2258 = vmatprep.subr.bf16.mxu0 %v1876
    %2259 = vmatpush2.bf16.msra.mxu0 %v1875
    %2260 = vmatprep.subr.bf16.mxu0 %v1872
    %2261 = vmatpush2.bf16.msra.mxu0 %v1871
    %2262 = vmatprep.subr.bf16.mxu0 %v1868
    %2263 = vmatpush2.bf16.msra.mxu0 %v1867
    %2264 = vmatprep.subr.bf16.mxu0 %v1864
    %2265 = vmatpush2.bf16.msra.mxu0 %v1863
    %2266 = vmatprep.subr.bf16.mxu0 %v1860
    %2267 = vmatpush2.bf16.msra.mxu0 %v1859
    %2268 = vmatprep.mubr.bf16.mxu0 %v1236
    %2269 = vmatmul.mubr.bf16.gmra.mxu0 %v1235
    %v2270 = vpop.f32.mrf.mxu0
    %v2271 = vadd.f32 %v2198, %v2270
    %v2272 = vpop.f32.mrf.mxu0
    %v2273 = vadd.f32 %v2200, %v2272
    %v2274 = vpop.f32.mrf.mxu0
    %v2275 = vadd.f32 %v2202, %v2274
    %v2276 = vpop.f32.mrf.mxu0
    %v2277 = vadd.f32 %v2204, %v2276
    %2278 = vmatprep.mubr.bf16.mxu0 %v1240
    %2279 = vmatmul.mubr.bf16.gmra.mxu0 %v1239
    %v2280 = vpop.f32.mrf.mxu0
    %v2281 = vadd.f32 %v2208, %v2280
    %v2282 = vpop.f32.mrf.mxu0
    %v2283 = vadd.f32 %v2210, %v2282
    %v2284 = vpop.f32.mrf.mxu0
    %v2285 = vadd.f32 %v2212, %v2284
    %v2286 = vpop.f32.mrf.mxu0
    %v2287 = vadd.f32 %v2214, %v2286
    %2288 = vmatprep.mubr.bf16.mxu0 %v1244
    %2289 = vmatmul.mubr.bf16.gmra.mxu0 %v1243
    %v2290 = vpop.f32.mrf.mxu0
    %v2291 = vadd.f32 %v2218, %v2290
    %v2292 = vpop.f32.mrf.mxu0
    %v2293 = vadd.f32 %v2220, %v2292
    %v2294 = vpop.f32.mrf.mxu0
    %v2295 = vadd.f32 %v2222, %v2294
    %v2296 = vpop.f32.mrf.mxu0
    %v2297 = vadd.f32 %v2224, %v2296
    %2298 = vmatprep.mubr.bf16.mxu0 %v1248
    %2299 = vmatmul.mubr.bf16.gmra.mxu0 %v1247
    %v2300 = vpop.f32.mrf.mxu0
    %v2301 = vadd.f32 %v2228, %v2300
    %v2302 = vpop.f32.mrf.mxu0
    %v2303 = vadd.f32 %v2230, %v2302
    %v2304 = vpop.f32.mrf.mxu0
    %v2305 = vadd.f32 %v2232, %v2304
    %v2306 = vpop.f32.mrf.mxu0
    %v2307 = vadd.f32 %v2234, %v2306
    %2308 = vdwg.mxu0
    %2309 = vst [vmem:[#allocation10] sm:$0xff] %v2125
    %2310 = vst [vmem:[#allocation10 + $0x8] sm:$0xff] %v2127
    %2311 = vst [vmem:[#allocation10 + $0x10] sm:$0xff] %v2271
    %2312 = vst [vmem:[#allocation10 + $0x18] sm:$0xff] %v2273
    %2313 = vst [vmem:[#allocation10 + $0x20] sm:$0xff] %v2129
    %2314 = vst [vmem:[#allocation10 + $0x28] sm:$0xff] %v2131
    %2315 = vst [vmem:[#allocation10 + $0x30] sm:$0xff] %v2275
    %2316 = vst [vmem:[#allocation10 + $0x38] sm:$0xff] %v2277
    %2317 = vst [vmem:[#allocation10 + $0x40] sm:$0xff] %v2135
    %2318 = vst [vmem:[#allocation10 + $0x48] sm:$0xff] %v2137
    %2319 = vst [vmem:[#allocation10 + $0x50] sm:$0xff] %v2281
    %2320 = vst [vmem:[#allocation10 + $0x58] sm:$0xff] %v2283
    %2321 = vst [vmem:[#allocation10 + $0x60] sm:$0xff] %v2139
    %2322 = vst [vmem:[#allocation10 + $0x68] sm:$0xff] %v2141
    %2323 = vst [vmem:[#allocation10 + $0x70] sm:$0xff] %v2285
    %2324 = vst [vmem:[#allocation10 + $0x78] sm:$0xff] %v2287
    %2325 = vst [vmem:[#allocation10 + $0x80] sm:$0xff] %v2145
    %2326 = vst [vmem:[#allocation10 + $0x88] sm:$0xff] %v2147
    %2327 = vst [vmem:[#allocation10 + $0x90] sm:$0xff] %v2291
    %2328 = vst [vmem:[#allocation10 + $0x98] sm:$0xff] %v2293
    %2329 = vst [vmem:[#allocation10 + $0xa0] sm:$0xff] %v2149
    %2330 = vst [vmem:[#allocation10 + $0xa8] sm:$0xff] %v2151
    %2331 = vst [vmem:[#allocation10 + $0xb0] sm:$0xff] %v2295
    %2332 = vst [vmem:[#allocation10 + $0xb8] sm:$0xff] %v2297
    %2333 = vst [vmem:[#allocation10 + $0xc0] sm:$0xff] %v2155
    %2334 = vst [vmem:[#allocation10 + $0xc8] sm:$0xff] %v2157
    %2335 = vst [vmem:[#allocation10 + $0xd0] sm:$0xff] %v2301
    %2336 = vst [vmem:[#allocation10 + $0xd8] sm:$0xff] %v2303
    %2337 = vst [vmem:[#allocation10 + $0xe0] sm:$0xff] %v2159
    %2338 = vst [vmem:[#allocation10 + $0xe8] sm:$0xff] %v2161
    %2339 = vst [vmem:[#allocation10 + $0xf0] sm:$0xff] %v2305
    %2340 = vst [vmem:[#allocation10 + $0xf8] sm:$0xff] %v2307
    // Predicated region
    $region34: #{tpu_custom_call.1} parent=1 // pred_check
      _
    $region35: #{tpu_custom_call.1} parent=1 // pred_check_branch
      %2342 = sbr.rel (0) target = $region37
    $region36: #{tpu_custom_call.1} parent=1 // pred_region
      %s2344 = ssub.s32 4096, 4096
      %2345 = vsyncadd [#allocation4], %s2344
      %s2346 = sshll.u32 [#allocation10], 4
      %s2347 = int_to_ptr.vmem [resolvable:$true] %s2346
      %2352 = dma.vmem_to_hbm [thread:$0]  %s2347, 4096, %s4, [#allocation4], 512, 512, 32
    $region37: #{tpu_custom_call.1} parent=1 // pred_fallthru
      _
    // Predicated region
    $region38: #{tpu_custom_call.1} parent=1 // pred_check
      _
    $region39: #{tpu_custom_call.1} parent=1 // pred_check_branch
      %2354 = sbr.rel (0) target = $region41
    $region40: #{tpu_custom_call.1} parent=1 // pred_region
      %2355 = dma.done [#allocation4], 4096
    $region41: #{tpu_custom_call.1} parent=1 // pred_fallthru
      _
    %2356 = vsyncpa [#allocation3], 1
    %2357 = vsyncpa [#allocation6], 1
    %2358 = vsyncpa [#allocation9], 1
    %2359 = vsyncpa [#allocation4], 1

</llo_original>
